<compile_context>
chip_gen: v7x
topology: tpu7x:2x2x1
jax: 0.10.0
libtpu: 0.0.40
codegen_flags: <defaults>
</compile_context>

<pallas_src>
import math
import functools

import jax
import jax.numpy as jnp
from jax.experimental import pallas as pl
from jax.experimental.pallas import tpu as pltpu

BN_EPS = 1e-5
_MXU_DTYPE = jnp.bfloat16            # MXU operand dtype (accumulation stays f32)
_VMEM_LIMIT = 32 * 1024 * 1024       # scoped limit: safe on v5e/v6e/v7x
_VMEM_BUDGET = 24 * 1024 * 1024      # tile-sizing budget, headroom under limit


def _round_up(x, m):
    return ((x + m - 1) // m) * m


# ----------------------------- Pallas kernels -----------------------------

def matmul_kernel(a_ref, w_ref, o_ref):
    # Weight block is resident (constant index_map); single dot per M tile.
    o_ref[...] = jnp.dot(a_ref[...], w_ref[...],
                         preferred_element_type=jnp.float32).astype(o_ref.dtype)


def matmul_add_kernel(a_ref, w_ref, r_ref, o_ref):
    acc = jnp.dot(a_ref[...], w_ref[...], preferred_element_type=jnp.float32)
    o_ref[...] = (acc + r_ref[...].astype(jnp.float32)).astype(o_ref.dtype)


def bn_stats_kernel(x_ref, sum_ref, sq_ref):
    # Per-channel sum / sum-of-squares into a resident (8, C) block.  The
    # (tm, C) -> (tm//8, 8, C) reshape is a free vreg relabel, so the per-tile
    # reduction is pure VPU adds; the single cross-sublane reduce happens
    # outside the kernel on an (8, C) array.
    @pl.when(pl.program_id(0) == 0)
    def _():
        sum_ref[...] = jnp.zeros_like(sum_ref)
        sq_ref[...] = jnp.zeros_like(sq_ref)

    x = x_ref[...].astype(jnp.float32)
    tm, c = x.shape
    xg = x.reshape(tm // 8, 8, c)
    sum_ref[...] += jnp.sum(xg, axis=0)
    sq_ref[...] += jnp.sum(xg * xg, axis=0)


def bn_apply_relu_kernel(x_ref, scale_ref, shift_ref, o_ref):
    x = x_ref[...].astype(jnp.float32)
    y = jnp.maximum(x * scale_ref[...] + shift_ref[...], 0.0)
    o_ref[...] = y.astype(o_ref.dtype)


# ------------------------------- wrappers ---------------------------------

def _matmul_tile_m(M, K, N, has_residual):
    """M-tile size: as large as the VMEM budget allows (mult. of 16 for bf16),
    preferring a divisor of M so no pad/slice copies are needed."""
    per_row = 2 * (K * 2) + 2 * (N * 4)          # 2x A bf16 + 2x out f32
    if has_residual:
        per_row += 2 * (N * 4)                   # 2x residual f32
    avail = _VMEM_BUDGET - 2 * (K * N * 2)       # resident bf16 weight (x2 safe)
    cap = max(16, min(1024, (avail // per_row) // 16 * 16))
    if M <= cap:
        return _round_up(M, 16)
    for t in range(cap, 15, -16):                # prefer no-pad tiling
        if M % t == 0:
            return t
    return cap


def pallas_matmul(a, w, residual=None, out_dtype=jnp.float32):
    """out = a @ w (+ residual).  Weight resident in VMEM, grid over M only."""
    M, K = a.shape
    K2, N = w.shape
    assert K == K2
    tm = _matmul_tile_m(M, K, N, residual is not None)
    Mp = _round_up(M, tm)

    a_p = a.astype(_MXU_DTYPE)
    if Mp != M:
        a_p = jnp.pad(a_p, ((0, Mp - M), (0, 0)))
    w_p = w.astype(_MXU_DTYPE)

    in_specs = [pl.BlockSpec((tm, K), lambda i: (i, 0)),
                pl.BlockSpec((K, N), lambda i: (0, 0))]   # resident weight
    operands = [a_p, w_p]
    if residual is not None:
        r_p = residual
        if Mp != M:
            r_p = jnp.pad(r_p, ((0, Mp - M), (0, 0)))
        in_specs.append(pl.BlockSpec((tm, N), lambda i: (i, 0)))
        operands.append(r_p)
        kernel = matmul_add_kernel
    else:
        kernel = matmul_kernel

    out = pl.pallas_call(
        kernel,
        out_shape=jax.ShapeDtypeStruct((Mp, N), out_dtype),
        grid=(Mp // tm,),
        in_specs=in_specs,
        out_specs=pl.BlockSpec((tm, N), lambda i: (i, 0)),
        compiler_params=pltpu.CompilerParams(
            dimension_semantics=("parallel",),        # M feeds v7x megacore
            vmem_limit_bytes=_VMEM_LIMIT),
    )(*operands)
    if Mp != M:
        out = out[:M]
    return out


def _bn_tile(M):
    """~1-4 MiB row tiles; pick a divisor of M (multiple of 8) to avoid any
    pad copy; fall back to padding only if M has no suitable divisor."""
    for t in (2048, 1024, 512, 256, 128, 64, 32, 16, 8):
        if t <= M and M % t == 0:
            return t, M
    tm = min(2048, _round_up(M, 8))
    return tm, _round_up(M, tm)


def bn_relu(x_nhwc, gamma, beta, out_dtype=jnp.bfloat16):
    """Training-mode BatchNorm (batch stats, biased variance) + ReLU."""
    N_, H, W, C = x_nhwc.shape
    M = N_ * H * W
    tm, Mp = _bn_tile(M)
    x2 = x_nhwc.reshape(M, C)                 # free reshape, no cast/pad copy
    if Mp != M:
        x2 = jnp.pad(x2, ((0, Mp - M), (0, 0)))   # zero rows: sums unaffected

    # pass 1: per-channel partial sums into a resident (8, C) accumulator
    psum, psq = pl.pallas_call(
        bn_stats_kernel,
        out_shape=(jax.ShapeDtypeStruct((8, C), jnp.float32),
                   jax.ShapeDtypeStruct((8, C), jnp.float32)),
        grid=(Mp // tm,),
        in_specs=[pl.BlockSpec((tm, C), lambda i: (i, 0))],
        out_specs=(pl.BlockSpec((8, C), lambda i: (0, 0)),
                   pl.BlockSpec((8, C), lambda i: (0, 0))),
        compiler_params=pltpu.CompilerParams(
            dimension_semantics=("arbitrary",),       # resident accumulator
            vmem_limit_bytes=_VMEM_LIMIT),
    )(x2)

    mean = jnp.sum(psum, axis=0, keepdims=True) / M          # (1, C)
    var = jnp.maximum(jnp.sum(psq, axis=0, keepdims=True) / M - mean * mean,
                      0.0)                                    # biased variance
    scale = gamma.reshape(1, C) * jax.lax.rsqrt(var + BN_EPS)
    shift = beta.reshape(1, C) - mean * scale

    # pass 2: fused affine + ReLU, emits bf16 ready for the MXU
    y = pl.pallas_call(
        bn_apply_relu_kernel,
        out_shape=jax.ShapeDtypeStruct((Mp, C), out_dtype),
        grid=(Mp // tm,),
        in_specs=[pl.BlockSpec((tm, C), lambda i: (i, 0)),
                  pl.BlockSpec((1, C), lambda i: (0, 0)),
                  pl.BlockSpec((1, C), lambda i: (0, 0))],
        out_specs=pl.BlockSpec((tm, C), lambda i: (i, 0)),
        compiler_params=pltpu.CompilerParams(
            dimension_semantics=("parallel",),
            vmem_limit_bytes=_VMEM_LIMIT),
    )(x2, scale.astype(jnp.float32), shift.astype(jnp.float32))
    if Mp != M:
        y = y[:M]
    return y.reshape(N_, H, W, C)


def _im2col_3x3(x_nhwc, stride):
    # glue only: 3x3 patch extraction (pad=1) in bf16; the matmul is Pallas.
    N_, H, W, C = x_nhwc.shape
    xp = jnp.pad(x_nhwc, ((0, 0), (1, 1), (1, 1), (0, 0)))
    Ho = (H + 2 - 3) // stride + 1
    Wo = (W + 2 - 3) // stride + 1
    cols = []
    for ky in range(3):
        for kx in range(3):
            cols.append(xp[:, ky:ky + (Ho - 1) * stride + 1:stride,
                           kx:kx + (Wo - 1) * stride + 1:stride, :])
    patches = jnp.stack(cols, axis=3)              # (N, Ho, Wo, 9, C)
    return patches.reshape(N_ * Ho * Wo, 9 * C), Ho, Wo


def conv3x3(x_nhwc, w_oihw, stride, residual_nhwc=None, out_dtype=jnp.float32):
    # w_oihw: (Cout, Cin, 3, 3), PyTorch layout, bias=False.
    N_ = x_nhwc.shape[0]
    Cout, Cin = w_oihw.shape[0], w_oihw.shape[1]
    patches, Ho, Wo = _im2col_3x3(x_nhwc, stride)
    wm = jnp.transpose(w_oihw, (2, 3, 1, 0)).reshape(9 * Cin, Cout)
    res = (residual_nhwc.reshape(N_ * Ho * Wo, Cout)
           if residual_nhwc is not None else None)
    out = pallas_matmul(patches, wm, residual=res, out_dtype=out_dtype)
    return out.reshape(N_, Ho, Wo, Cout)


def conv1x1(x_nhwc, w_oihw, stride, out_dtype=jnp.float32):
    # 1x1 shortcut conv: strided subsample (glue) + channel matmul in Pallas.
    N_, H, W, Cin = x_nhwc.shape
    Cout = w_oihw.shape[0]
    xs = x_nhwc[:, ::stride, ::stride, :]
    Ho, Wo = xs.shape[1], xs.shape[2]
    wm = jnp.transpose(w_oihw, (2, 3, 1, 0)).reshape(Cin, Cout)
    out = pallas_matmul(xs.reshape(N_ * Ho * Wo, Cin), wm, out_dtype=out_dtype)
    return out.reshape(N_, Ho, Wo, Cout)


def basic_block(x_nhwc, p, stride, equal_in_out):
    a = bn_relu(x_nhwc, p["bn1_g"], p["bn1_b"])        # relu1(bn1(x)) -> bf16
    c1 = conv3x3(a, p["conv1_w"], stride, out_dtype=jnp.float32)
    b = bn_relu(c1, p["bn2_g"], p["bn2_b"])            # relu2(bn2(conv1)) -> bf16
    if equal_in_out:
        shortcut = x_nhwc
    else:
        shortcut = conv1x1(a, p["convsc_w"], stride, out_dtype=jnp.float32)
    # residual add fused into the conv2 matmul epilogue (kept in f32)
    return conv3x3(b, p["conv2_w"], 1, residual_nhwc=shortcut,
                   out_dtype=jnp.float32)


def network_block(x_nhwc, layer_params, in_planes, out_planes, stride):
    out = x_nhwc
    for i, p in enumerate(layer_params):
        s = stride if i == 0 else 1
        in_p = in_planes if i == 0 else out_planes
        out = basic_block(out, p, s, equal_in_out=(in_p == out_planes))
    return out


def network_block_nchw(x_nchw, layer_params, in_planes, out_planes, stride):
    x = jnp.transpose(x_nchw, (0, 2, 3, 1))            # NCHW -> NHWC
    y = network_block(x, layer_params, in_planes, out_planes, stride)
    return jnp.transpose(y, (0, 3, 1, 2))              # NHWC -> NCHW


# --------------------------- deterministic init ----------------------------

def init_network_block_params(key, nb_layers, in_planes, out_planes):
    params = []
    for i in range(nb_layers):
        in_p = in_planes if i == 0 else out_planes
        key, k1, k2, k3, k4, k5, k6, k7 = jax.random.split(key, 8)
        n3 = 3 * 3 * out_planes
        p = {
            "bn1_g": 1.0 + 0.1 * jax.random.normal(k1, (in_p,), jnp.float32),
            "bn1_b": 0.1 * jax.random.normal(k2, (in_p,), jnp.float32),
            "conv1_w": jax.random.normal(k3, (out_planes, in_p, 3, 3), jnp.float32)
                       * math.sqrt(2.0 / n3),
            "bn2_g": 1.0 + 0.1 * jax.random.normal(k4, (out_planes,), jnp.float32),
            "bn2_b": 0.1 * jax.random.normal(k5, (out_planes,), jnp.float32),
            "conv2_w": jax.random.normal(k6, (out_planes, out_planes, 3, 3), jnp.float32)
                       * math.sqrt(2.0 / n3),
        }
        if in_p != out_planes:
            n1 = 1 * 1 * out_planes
            p["convsc_w"] = (jax.random.normal(k7, (out_planes, in_p, 1, 1), jnp.float32)
                             * math.sqrt(2.0 / n1))
        params.append(p)
    return params


if __name__ == "__main__":
    key = jax.random.PRNGKey(0)
    kx, kp = jax.random.split(key)

    # NetworkBlock(nb_layers=2, in_planes=4, out_planes=8, block=BasicBlock, stride=2)
    nb_layers, in_planes, out_planes, stride = 2, 4, 8, 2
    x = jax.random.normal(kx, (2, in_planes, 16, 16), jnp.float32)   # NCHW input

    params = init_network_block_params(kp, nb_layers, in_planes, out_planes)
    fwd = jax.jit(functools.partial(network_block_nchw,
                                    in_planes=in_planes,
                                    out_planes=out_planes,
                                    stride=stride))
    y = jax.block_until_ready(fwd(x, params))

    assert y.shape == (2, out_planes, 16 // stride, 16 // stride), y.shape
    assert bool(jnp.all(jnp.isfinite(y)))
    print("KERNEL_OK")
</pallas_src>

<mosaic_0001>
module attributes {stable_mosaic.version = 11 : i64} {
  func.func @bn_stats_kernel(%arg0: i32, %arg1: memref<512x4xf32, #tpu.memory_space<vmem>>, %arg2: memref<8x4xf32, #tpu.memory_space<vmem>>, %arg3: memref<8x4xf32, #tpu.memory_space<vmem>>) attributes {dimension_semantics = [#tpu.dimension_semantics<arbitrary>], iteration_bounds = array<i64: 1>, scalar_prefetch = 0 : i64, scratch_operands = 0 : i64, tpu.core_type = #tpu.core_type<tc>, window_params = [{transform_indices = @transform_0, window_bounds = array<i64: 512, 4>}, {pipeline_mode = #tpu.pipeline_mode<synchronous>, transform_indices = @transform_1, window_bounds = array<i64: 8, 4>}, {pipeline_mode = #tpu.pipeline_mode<synchronous>, transform_indices = @transform_2, window_bounds = array<i64: 8, 4>}]} {
    %c0_i32 = arith.constant 0 : i32
    %0 = arith.cmpi eq, %arg0, %c0_i32 : i32
    %1 = arith.extui %0 : i1 to i32
    %c0_i32_0 = arith.constant 0 : i32
    %2 = arith.cmpi ne, %1, %c0_i32_0 : i32
    scf.if %2 {
      %cst_11 = arith.constant 0.000000e+00 : f32
      %14 = vector.broadcast %cst_11 : f32 to vector<8x4xf32>
      %c0_12 = arith.constant 0 : index
      %c0_13 = arith.constant 0 : index
      %15 = vector.load %arg2[%c0_12, %c0_13] : memref<8x4xf32, #tpu.memory_space<vmem>>, vector<8x4xf32>
      tpu.vector_store %arg2[%c0_12, %c0_13], %14 {strides = array<i32>} : memref<8x4xf32, #tpu.memory_space<vmem>>, vector<8x4xf32>,
      %cst_14 = arith.constant 0.000000e+00 : f32
      %16 = vector.broadcast %cst_14 : f32 to vector<8x4xf32>
      %c0_15 = arith.constant 0 : index
      %c0_16 = arith.constant 0 : index
      %17 = vector.load %arg3[%c0_15, %c0_16] : memref<8x4xf32, #tpu.memory_space<vmem>>, vector<8x4xf32>
      tpu.vector_store %arg3[%c0_15, %c0_16], %16 {strides = array<i32>} : memref<8x4xf32, #tpu.memory_space<vmem>>, vector<8x4xf32>,
    } else {
    }
    %c0 = arith.constant 0 : index
    %c0_1 = arith.constant 0 : index
    %3 = vector.load %arg1[%c0, %c0_1] : memref<512x4xf32, #tpu.memory_space<vmem>>, vector<512x4xf32>
    %4 = vector.shape_cast %3 : vector<512x4xf32> to vector<64x8x4xf32>
    %c0_2 = arith.constant 0 : index
    %c0_3 = arith.constant 0 : index
    %5 = vector.load %arg2[%c0_2, %c0_3] : memref<8x4xf32, #tpu.memory_space<vmem>>, vector<8x4xf32>
    %cst = arith.constant dense<0.000000e+00> : vector<8x4xf32>
    %6 = vector.multi_reduction <add>, %4, %cst [0] : vector<64x8x4xf32> to vector<8x4xf32>
    %7 = arith.addf %5, %6 : vector<8x4xf32>
    %c0_4 = arith.constant 0 : index
    %c0_5 = arith.constant 0 : index
    %8 = vector.load %arg2[%c0_4, %c0_5] : memref<8x4xf32, #tpu.memory_space<vmem>>, vector<8x4xf32>
    tpu.vector_store %arg2[%c0_4, %c0_5], %7 {strides = array<i32>} : memref<8x4xf32, #tpu.memory_space<vmem>>, vector<8x4xf32>,
    %c0_6 = arith.constant 0 : index
    %c0_7 = arith.constant 0 : index
    %9 = vector.load %arg3[%c0_6, %c0_7] : memref<8x4xf32, #tpu.memory_space<vmem>>, vector<8x4xf32>
    %10 = arith.mulf %4, %4 : vector<64x8x4xf32>
    %cst_8 = arith.constant dense<0.000000e+00> : vector<8x4xf32>
    %11 = vector.multi_reduction <add>, %10, %cst_8 [0] : vector<64x8x4xf32> to vector<8x4xf32>
    %12 = arith.addf %9, %11 : vector<8x4xf32>
    %c0_9 = arith.constant 0 : index
    %c0_10 = arith.constant 0 : index
    %13 = vector.load %arg3[%c0_9, %c0_10] : memref<8x4xf32, #tpu.memory_space<vmem>>, vector<8x4xf32>
    tpu.vector_store %arg3[%c0_9, %c0_10], %12 {strides = array<i32>} : memref<8x4xf32, #tpu.memory_space<vmem>>, vector<8x4xf32>,
    return
  }
  func.func @transform_0(%arg0: i32) -> (i32, i32) {
    %c0_i32 = arith.constant 0 : i32
    %c0_i32_0 = arith.constant 0 : i32
    return %arg0, %c0_i32 : i32, i32
  }
  func.func @transform_1(%arg0: i32) -> (i32, i32) {
    %c0_i32 = arith.constant 0 : i32
    %c0_i32_0 = arith.constant 0 : i32
    %c0_i32_1 = arith.constant 0 : i32
    return %c0_i32, %c0_i32_0 : i32, i32
  }
  func.func @transform_2(%arg0: i32) -> (i32, i32) {
    %c0_i32 = arith.constant 0 : i32
    %c0_i32_0 = arith.constant 0 : i32
    %c0_i32_1 = arith.constant 0 : i32
    return %c0_i32, %c0_i32_0 : i32, i32
  }
}

module attributes {stable_mosaic.version = 11 : i64} {
  func.func @bn_apply_relu_kernel(%arg0: i32, %arg1: memref<512x4xf32, #tpu.memory_space<vmem>>, %arg2: memref<1x4xf32, #tpu.memory_space<vmem>>, %arg3: memref<1x4xf32, #tpu.memory_space<vmem>>, %arg4: memref<512x4xbf16, #tpu.memory_space<vmem>>) attributes {dimension_semantics = [#tpu.dimension_semantics<parallel>], iteration_bounds = array<i64: 1>, scalar_prefetch = 0 : i64, scratch_operands = 0 : i64, tpu.core_type = #tpu.core_type<tc>, window_params = [{transform_indices = @transform_0, window_bounds = array<i64: 512, 4>}, {pipeline_mode = #tpu.pipeline_mode<synchronous>, transform_indices = @transform_1, window_bounds = array<i64: 1, 4>}, {pipeline_mode = #tpu.pipeline_mode<synchronous>, transform_indices = @transform_2, window_bounds = array<i64: 1, 4>}, {transform_indices = @transform_3, window_bounds = array<i64: 512, 4>}]} {
    %c0 = arith.constant 0 : index
    %c0_0 = arith.constant 0 : index
    %0 = vector.load %arg1[%c0, %c0_0] : memref<512x4xf32, #tpu.memory_space<vmem>>, vector<512x4xf32>
    %c0_1 = arith.constant 0 : index
    %c0_2 = arith.constant 0 : index
    %1 = vector.load %arg2[%c0_1, %c0_2] : memref<1x4xf32, #tpu.memory_space<vmem>>, vector<1x4xf32>
    %2 = vector.broadcast %1 : vector<1x4xf32> to vector<512x4xf32>
    %3 = arith.mulf %0, %2 : vector<512x4xf32>
    %c0_3 = arith.constant 0 : index
    %c0_4 = arith.constant 0 : index
    %4 = vector.load %arg3[%c0_3, %c0_4] : memref<1x4xf32, #tpu.memory_space<vmem>>, vector<1x4xf32>
    %5 = vector.broadcast %4 : vector<1x4xf32> to vector<512x4xf32>
    %6 = arith.addf %3, %5 : vector<512x4xf32>
    %cst = arith.constant 0.000000e+00 : f32
    %7 = vector.broadcast %cst : f32 to vector<512x4xf32>
    %8 = arith.maximumf %6, %7 : vector<512x4xf32>
    %9 = arith.truncf %8 : vector<512x4xf32> to vector<512x4xbf16>
    %c0_5 = arith.constant 0 : index
    %c0_6 = arith.constant 0 : index
    %10 = vector.load %arg4[%c0_5, %c0_6] : memref<512x4xbf16, #tpu.memory_space<vmem>>, vector<512x4xbf16>
    tpu.vector_store %arg4[%c0_5, %c0_6], %9 {strides = array<i32>} : memref<512x4xbf16, #tpu.memory_space<vmem>>, vector<512x4xbf16>,
    return
  }
  func.func @transform_0(%arg0: i32) -> (i32, i32) {
    %c0_i32 = arith.constant 0 : i32
    %c0_i32_0 = arith.constant 0 : i32
    return %arg0, %c0_i32 : i32, i32
  }
  func.func @transform_1(%arg0: i32) -> (i32, i32) {
    %c0_i32 = arith.constant 0 : i32
    %c0_i32_0 = arith.constant 0 : i32
    %c0_i32_1 = arith.constant 0 : i32
    return %c0_i32, %c0_i32_0 : i32, i32
  }
  func.func @transform_2(%arg0: i32) -> (i32, i32) {
    %c0_i32 = arith.constant 0 : i32
    %c0_i32_0 = arith.constant 0 : i32
    %c0_i32_1 = arith.constant 0 : i32
    return %c0_i32, %c0_i32_0 : i32, i32
  }
  func.func @transform_3(%arg0: i32) -> (i32, i32) {
    %c0_i32 = arith.constant 0 : i32
    %c0_i32_0 = arith.constant 0 : i32
    return %arg0, %c0_i32 : i32, i32
  }
}

module attributes {stable_mosaic.version = 11 : i64} {
  func.func @matmul_kernel(%arg0: i32, %arg1: memref<128x4xbf16, #tpu.memory_space<vmem>>, %arg2: memref<4x8xbf16, #tpu.memory_space<vmem>>, %arg3: memref<128x8xf32, #tpu.memory_space<vmem>>) attributes {dimension_semantics = [#tpu.dimension_semantics<parallel>], iteration_bounds = array<i64: 1>, scalar_prefetch = 0 : i64, scratch_operands = 0 : i64, tpu.core_type = #tpu.core_type<tc>, window_params = [{transform_indices = @transform_0, window_bounds = array<i64: 128, 4>}, {pipeline_mode = #tpu.pipeline_mode<synchronous>, transform_indices = @transform_1, window_bounds = array<i64: 4, 8>}, {transform_indices = @transform_2, window_bounds = array<i64: 128, 8>}]} {
    %c0 = arith.constant 0 : index
    %c0_0 = arith.constant 0 : index
    %0 = vector.load %arg1[%c0, %c0_0] : memref<128x4xbf16, #tpu.memory_space<vmem>>, vector<128x4xbf16>
    %c0_1 = arith.constant 0 : index
    %c0_2 = arith.constant 0 : index
    %1 = vector.load %arg2[%c0_1, %c0_2] : memref<4x8xbf16, #tpu.memory_space<vmem>>, vector<4x8xbf16>
    %cst = arith.constant dense<0.000000e+00> : vector<128x8xf32>
    %2 = tpu.matmul %0, %1, %cst {dimension_numbers = #tpu.dot_dimension_numbers<[1], [0], [0], [1], [0, 0, 1, 1], [], []>} : vector<128x4xbf16>, vector<4x8xbf16>, vector<128x8xf32> -> vector<128x8xf32>
    %c0_3 = arith.constant 0 : index
    %c0_4 = arith.constant 0 : index
    %3 = vector.load %arg3[%c0_3, %c0_4] : memref<128x8xf32, #tpu.memory_space<vmem>>, vector<128x8xf32>
    tpu.vector_store %arg3[%c0_3, %c0_4], %2 {strides = array<i32>} : memref<128x8xf32, #tpu.memory_space<vmem>>, vector<128x8xf32>,
    return
  }
  func.func @transform_0(%arg0: i32) -> (i32, i32) {
    %c0_i32 = arith.constant 0 : i32
    %c0_i32_0 = arith.constant 0 : i32
    return %arg0, %c0_i32 : i32, i32
  }
  func.func @transform_1(%arg0: i32) -> (i32, i32) {
    %c0_i32 = arith.constant 0 : i32
    %c0_i32_0 = arith.constant 0 : i32
    %c0_i32_1 = arith.constant 0 : i32
    return %c0_i32, %c0_i32_0 : i32, i32
  }
  func.func @transform_2(%arg0: i32) -> (i32, i32) {
    %c0_i32 = arith.constant 0 : i32
    %c0_i32_0 = arith.constant 0 : i32
    return %arg0, %c0_i32 : i32, i32
  }
}

module attributes {stable_mosaic.version = 11 : i64} {
  func.func @bn_stats_kernel(%arg0: i32, %arg1: memref<128x8xf32, #tpu.memory_space<vmem>>, %arg2: memref<8x8xf32, #tpu.memory_space<vmem>>, %arg3: memref<8x8xf32, #tpu.memory_space<vmem>>) attributes {dimension_semantics = [#tpu.dimension_semantics<arbitrary>], iteration_bounds = array<i64: 1>, scalar_prefetch = 0 : i64, scratch_operands = 0 : i64, tpu.core_type = #tpu.core_type<tc>, window_params = [{transform_indices = @transform_0, window_bounds = array<i64: 128, 8>}, {pipeline_mode = #tpu.pipeline_mode<synchronous>, transform_indices = @transform_1, window_bounds = array<i64: 8, 8>}, {pipeline_mode = #tpu.pipeline_mode<synchronous>, transform_indices = @transform_2, window_bounds = array<i64: 8, 8>}]} {
    %c0_i32 = arith.constant 0 : i32
    %0 = arith.cmpi eq, %arg0, %c0_i32 : i32
    %1 = arith.extui %0 : i1 to i32
    %c0_i32_0 = arith.constant 0 : i32
    %2 = arith.cmpi ne, %1, %c0_i32_0 : i32
    scf.if %2 {
      %cst_11 = arith.constant 0.000000e+00 : f32
      %14 = vector.broadcast %cst_11 : f32 to vector<8x8xf32>
      %c0_12 = arith.constant 0 : index
      %c0_13 = arith.constant 0 : index
      %15 = vector.load %arg2[%c0_12, %c0_13] : memref<8x8xf32, #tpu.memory_space<vmem>>, vector<8x8xf32>
      tpu.vector_store %arg2[%c0_12, %c0_13], %14 {strides = array<i32>} : memref<8x8xf32, #tpu.memory_space<vmem>>, vector<8x8xf32>,
      %cst_14 = arith.constant 0.000000e+00 : f32
      %16 = vector.broadcast %cst_14 : f32 to vector<8x8xf32>
      %c0_15 = arith.constant 0 : index
      %c0_16 = arith.constant 0 : index
      %17 = vector.load %arg3[%c0_15, %c0_16] : memref<8x8xf32, #tpu.memory_space<vmem>>, vector<8x8xf32>
      tpu.vector_store %arg3[%c0_15, %c0_16], %16 {strides = array<i32>} : memref<8x8xf32, #tpu.memory_space<vmem>>, vector<8x8xf32>,
    } else {
    }
    %c0 = arith.constant 0 : index
    %c0_1 = arith.constant 0 : index
    %3 = vector.load %arg1[%c0, %c0_1] : memref<128x8xf32, #tpu.memory_space<vmem>>, vector<128x8xf32>
    %4 = vector.shape_cast %3 : vector<128x8xf32> to vector<16x8x8xf32>
    %c0_2 = arith.constant 0 : index
    %c0_3 = arith.constant 0 : index
    %5 = vector.load %arg2[%c0_2, %c0_3] : memref<8x8xf32, #tpu.memory_space<vmem>>, vector<8x8xf32>
    %cst = arith.constant dense<0.000000e+00> : vector<8x8xf32>
    %6 = vector.multi_reduction <add>, %4, %cst [0] : vector<16x8x8xf32> to vector<8x8xf32>
    %7 = arith.addf %5, %6 : vector<8x8xf32>
    %c0_4 = arith.constant 0 : index
    %c0_5 = arith.constant 0 : index
    %8 = vector.load %arg2[%c0_4, %c0_5] : memref<8x8xf32, #tpu.memory_space<vmem>>, vector<8x8xf32>
    tpu.vector_store %arg2[%c0_4, %c0_5], %7 {strides = array<i32>} : memref<8x8xf32, #tpu.memory_space<vmem>>, vector<8x8xf32>,
    %c0_6 = arith.constant 0 : index
    %c0_7 = arith.constant 0 : index
    %9 = vector.load %arg3[%c0_6, %c0_7] : memref<8x8xf32, #tpu.memory_space<vmem>>, vector<8x8xf32>
    %10 = arith.mulf %4, %4 : vector<16x8x8xf32>
    %cst_8 = arith.constant dense<0.000000e+00> : vector<8x8xf32>
    %11 = vector.multi_reduction <add>, %10, %cst_8 [0] : vector<16x8x8xf32> to vector<8x8xf32>
    %12 = arith.addf %9, %11 : vector<8x8xf32>
    %c0_9 = arith.constant 0 : index
    %c0_10 = arith.constant 0 : index
    %13 = vector.load %arg3[%c0_9, %c0_10] : memref<8x8xf32, #tpu.memory_space<vmem>>, vector<8x8xf32>
    tpu.vector_store %arg3[%c0_9, %c0_10], %12 {strides = array<i32>} : memref<8x8xf32, #tpu.memory_space<vmem>>, vector<8x8xf32>,
    return
  }
  func.func @transform_0(%arg0: i32) -> (i32, i32) {
    %c0_i32 = arith.constant 0 : i32
    %c0_i32_0 = arith.constant 0 : i32
    return %arg0, %c0_i32 : i32, i32
  }
  func.func @transform_1(%arg0: i32) -> (i32, i32) {
    %c0_i32 = arith.constant 0 : i32
    %c0_i32_0 = arith.constant 0 : i32
    %c0_i32_1 = arith.constant 0 : i32
    return %c0_i32, %c0_i32_0 : i32, i32
  }
  func.func @transform_2(%arg0: i32) -> (i32, i32) {
    %c0_i32 = arith.constant 0 : i32
    %c0_i32_0 = arith.constant 0 : i32
    %c0_i32_1 = arith.constant 0 : i32
    return %c0_i32, %c0_i32_0 : i32, i32
  }
}

module attributes {stable_mosaic.version = 11 : i64} {
  func.func @matmul_kernel(%arg0: i32, %arg1: memref<128x36xbf16, #tpu.memory_space<vmem>>, %arg2: memref<36x8xbf16, #tpu.memory_space<vmem>>, %arg3: memref<128x8xf32, #tpu.memory_space<vmem>>) attributes {dimension_semantics = [#tpu.dimension_semantics<parallel>], iteration_bounds = array<i64: 1>, scalar_prefetch = 0 : i64, scratch_operands = 0 : i64, tpu.core_type = #tpu.core_type<tc>, window_params = [{transform_indices = @transform_0, window_bounds = array<i64: 128, 36>}, {pipeline_mode = #tpu.pipeline_mode<synchronous>, transform_indices = @transform_1, window_bounds = array<i64: 36, 8>}, {transform_indices = @transform_2, window_bounds = array<i64: 128, 8>}]} {
    %c0 = arith.constant 0 : index
    %c0_0 = arith.constant 0 : index
    %0 = vector.load %arg1[%c0, %c0_0] : memref<128x36xbf16, #tpu.memory_space<vmem>>, vector<128x36xbf16>
    %c0_1 = arith.constant 0 : index
    %c0_2 = arith.constant 0 : index
    %1 = vector.load %arg2[%c0_1, %c0_2] : memref<36x8xbf16, #tpu.memory_space<vmem>>, vector<36x8xbf16>
    %cst = arith.constant dense<0.000000e+00> : vector<128x8xf32>
    %2 = tpu.matmul %0, %1, %cst {dimension_numbers = #tpu.dot_dimension_numbers<[1], [0], [0], [1], [0, 0, 1, 1], [], []>} : vector<128x36xbf16>, vector<36x8xbf16>, vector<128x8xf32> -> vector<128x8xf32>
    %c0_3 = arith.constant 0 : index
    %c0_4 = arith.constant 0 : index
    %3 = vector.load %arg3[%c0_3, %c0_4] : memref<128x8xf32, #tpu.memory_space<vmem>>, vector<128x8xf32>
    tpu.vector_store %arg3[%c0_3, %c0_4], %2 {strides = array<i32>} : memref<128x8xf32, #tpu.memory_space<vmem>>, vector<128x8xf32>,
    return
  }
  func.func @transform_0(%arg0: i32) -> (i32, i32) {
    %c0_i32 = arith.constant 0 : i32
    %c0_i32_0 = arith.constant 0 : i32
    return %arg0, %c0_i32 : i32, i32
  }
  func.func @transform_1(%arg0: i32) -> (i32, i32) {
    %c0_i32 = arith.constant 0 : i32
    %c0_i32_0 = arith.constant 0 : i32
    %c0_i32_1 = arith.constant 0 : i32
    return %c0_i32, %c0_i32_0 : i32, i32
  }
  func.func @transform_2(%arg0: i32) -> (i32, i32) {
    %c0_i32 = arith.constant 0 : i32
    %c0_i32_0 = arith.constant 0 : i32
    return %arg0, %c0_i32 : i32, i32
  }
}

module attributes {stable_mosaic.version = 11 : i64} {
  func.func @bn_apply_relu_kernel(%arg0: i32, %arg1: memref<128x8xf32, #tpu.memory_space<vmem>>, %arg2: memref<1x8xf32, #tpu.memory_space<vmem>>, %arg3: memref<1x8xf32, #tpu.memory_space<vmem>>, %arg4: memref<128x8xbf16, #tpu.memory_space<vmem>>) attributes {dimension_semantics = [#tpu.dimension_semantics<parallel>], iteration_bounds = array<i64: 1>, scalar_prefetch = 0 : i64, scratch_operands = 0 : i64, tpu.core_type = #tpu.core_type<tc>, window_params = [{transform_indices = @transform_0, window_bounds = array<i64: 128, 8>}, {pipeline_mode = #tpu.pipeline_mode<synchronous>, transform_indices = @transform_1, window_bounds = array<i64: 1, 8>}, {pipeline_mode = #tpu.pipeline_mode<synchronous>, transform_indices = @transform_2, window_bounds = array<i64: 1, 8>}, {transform_indices = @transform_3, window_bounds = array<i64: 128, 8>}]} {
    %c0 = arith.constant 0 : index
    %c0_0 = arith.constant 0 : index
    %0 = vector.load %arg1[%c0, %c0_0] : memref<128x8xf32, #tpu.memory_space<vmem>>, vector<128x8xf32>
    %c0_1 = arith.constant 0 : index
    %c0_2 = arith.constant 0 : index
    %1 = vector.load %arg2[%c0_1, %c0_2] : memref<1x8xf32, #tpu.memory_space<vmem>>, vector<1x8xf32>
    %2 = vector.broadcast %1 : vector<1x8xf32> to vector<128x8xf32>
    %3 = arith.mulf %0, %2 : vector<128x8xf32>
    %c0_3 = arith.constant 0 : index
    %c0_4 = arith.constant 0 : index
    %4 = vector.load %arg3[%c0_3, %c0_4] : memref<1x8xf32, #tpu.memory_space<vmem>>, vector<1x8xf32>
    %5 = vector.broadcast %4 : vector<1x8xf32> to vector<128x8xf32>
    %6 = arith.addf %3, %5 : vector<128x8xf32>
    %cst = arith.constant 0.000000e+00 : f32
    %7 = vector.broadcast %cst : f32 to vector<128x8xf32>
    %8 = arith.maximumf %6, %7 : vector<128x8xf32>
    %9 = arith.truncf %8 : vector<128x8xf32> to vector<128x8xbf16>
    %c0_5 = arith.constant 0 : index
    %c0_6 = arith.constant 0 : index
    %10 = vector.load %arg4[%c0_5, %c0_6] : memref<128x8xbf16, #tpu.memory_space<vmem>>, vector<128x8xbf16>
    tpu.vector_store %arg4[%c0_5, %c0_6], %9 {strides = array<i32>} : memref<128x8xbf16, #tpu.memory_space<vmem>>, vector<128x8xbf16>,
    return
  }
  func.func @transform_0(%arg0: i32) -> (i32, i32) {
    %c0_i32 = arith.constant 0 : i32
    %c0_i32_0 = arith.constant 0 : i32
    return %arg0, %c0_i32 : i32, i32
  }
  func.func @transform_1(%arg0: i32) -> (i32, i32) {
    %c0_i32 = arith.constant 0 : i32
    %c0_i32_0 = arith.constant 0 : i32
    %c0_i32_1 = arith.constant 0 : i32
    return %c0_i32, %c0_i32_0 : i32, i32
  }
  func.func @transform_2(%arg0: i32) -> (i32, i32) {
    %c0_i32 = arith.constant 0 : i32
    %c0_i32_0 = arith.constant 0 : i32
    %c0_i32_1 = arith.constant 0 : i32
    return %c0_i32, %c0_i32_0 : i32, i32
  }
  func.func @transform_3(%arg0: i32) -> (i32, i32) {
    %c0_i32 = arith.constant 0 : i32
    %c0_i32_0 = arith.constant 0 : i32
    return %arg0, %c0_i32 : i32, i32
  }
}

module attributes {stable_mosaic.version = 11 : i64} {
  func.func @matmul_add_kernel(%arg0: i32, %arg1: memref<128x72xbf16, #tpu.memory_space<vmem>>, %arg2: memref<72x8xbf16, #tpu.memory_space<vmem>>, %arg3: memref<128x8xf32, #tpu.memory_space<vmem>>, %arg4: memref<128x8xf32, #tpu.memory_space<vmem>>) attributes {dimension_semantics = [#tpu.dimension_semantics<parallel>], iteration_bounds = array<i64: 1>, scalar_prefetch = 0 : i64, scratch_operands = 0 : i64, tpu.core_type = #tpu.core_type<tc>, window_params = [{transform_indices = @transform_0, window_bounds = array<i64: 128, 72>}, {pipeline_mode = #tpu.pipeline_mode<synchronous>, transform_indices = @transform_1, window_bounds = array<i64: 72, 8>}, {transform_indices = @transform_2, window_bounds = array<i64: 128, 8>}, {transform_indices = @transform_3, window_bounds = array<i64: 128, 8>}]} {
    %c0 = arith.constant 0 : index
    %c0_0 = arith.constant 0 : index
    %0 = vector.load %arg1[%c0, %c0_0] : memref<128x72xbf16, #tpu.memory_space<vmem>>, vector<128x72xbf16>
    %c0_1 = arith.constant 0 : index
    %c0_2 = arith.constant 0 : index
    %1 = vector.load %arg2[%c0_1, %c0_2] : memref<72x8xbf16, #tpu.memory_space<vmem>>, vector<72x8xbf16>
    %cst = arith.constant dense<0.000000e+00> : vector<128x8xf32>
    %2 = tpu.matmul %0, %1, %cst {dimension_numbers = #tpu.dot_dimension_numbers<[1], [0], [0], [1], [0, 0, 1, 1], [], []>} : vector<128x72xbf16>, vector<72x8xbf16>, vector<128x8xf32> -> vector<128x8xf32>
    %c0_3 = arith.constant 0 : index
    %c0_4 = arith.constant 0 : index
    %3 = vector.load %arg3[%c0_3, %c0_4] : memref<128x8xf32, #tpu.memory_space<vmem>>, vector<128x8xf32>
    %4 = arith.addf %2, %3 : vector<128x8xf32>
    %c0_5 = arith.constant 0 : index
    %c0_6 = arith.constant 0 : index
    %5 = vector.load %arg4[%c0_5, %c0_6] : memref<128x8xf32, #tpu.memory_space<vmem>>, vector<128x8xf32>
    tpu.vector_store %arg4[%c0_5, %c0_6], %4 {strides = array<i32>} : memref<128x8xf32, #tpu.memory_space<vmem>>, vector<128x8xf32>,
    return
  }
  func.func @transform_0(%arg0: i32) -> (i32, i32) {
    %c0_i32 = arith.constant 0 : i32
    %c0_i32_0 = arith.constant 0 : i32
    return %arg0, %c0_i32 : i32, i32
  }
  func.func @transform_1(%arg0: i32) -> (i32, i32) {
    %c0_i32 = arith.constant 0 : i32
    %c0_i32_0 = arith.constant 0 : i32
    %c0_i32_1 = arith.constant 0 : i32
    return %c0_i32, %c0_i32_0 : i32, i32
  }
  func.func @transform_2(%arg0: i32) -> (i32, i32) {
    %c0_i32 = arith.constant 0 : i32
    %c0_i32_0 = arith.constant 0 : i32
    return %arg0, %c0_i32 : i32, i32
  }
  func.func @transform_3(%arg0: i32) -> (i32, i32) {
    %c0_i32 = arith.constant 0 : i32
    %c0_i32_0 = arith.constant 0 : i32
    return %arg0, %c0_i32 : i32, i32
  }
}

module attributes {stable_mosaic.version = 11 : i64} {
  func.func @matmul_kernel(%arg0: i32, %arg1: memref<128x72xbf16, #tpu.memory_space<vmem>>, %arg2: memref<72x8xbf16, #tpu.memory_space<vmem>>, %arg3: memref<128x8xf32, #tpu.memory_space<vmem>>) attributes {dimension_semantics = [#tpu.dimension_semantics<parallel>], iteration_bounds = array<i64: 1>, scalar_prefetch = 0 : i64, scratch_operands = 0 : i64, tpu.core_type = #tpu.core_type<tc>, window_params = [{transform_indices = @transform_0, window_bounds = array<i64: 128, 72>}, {pipeline_mode = #tpu.pipeline_mode<synchronous>, transform_indices = @transform_1, window_bounds = array<i64: 72, 8>}, {transform_indices = @transform_2, window_bounds = array<i64: 128, 8>}]} {
    %c0 = arith.constant 0 : index
    %c0_0 = arith.constant 0 : index
    %0 = vector.load %arg1[%c0, %c0_0] : memref<128x72xbf16, #tpu.memory_space<vmem>>, vector<128x72xbf16>
    %c0_1 = arith.constant 0 : index
    %c0_2 = arith.constant 0 : index
    %1 = vector.load %arg2[%c0_1, %c0_2] : memref<72x8xbf16, #tpu.memory_space<vmem>>, vector<72x8xbf16>
    %cst = arith.constant dense<0.000000e+00> : vector<128x8xf32>
    %2 = tpu.matmul %0, %1, %cst {dimension_numbers = #tpu.dot_dimension_numbers<[1], [0], [0], [1], [0, 0, 1, 1], [], []>} : vector<128x72xbf16>, vector<72x8xbf16>, vector<128x8xf32> -> vector<128x8xf32>
    %c0_3 = arith.constant 0 : index
    %c0_4 = arith.constant 0 : index
    %3 = vector.load %arg3[%c0_3, %c0_4] : memref<128x8xf32, #tpu.memory_space<vmem>>, vector<128x8xf32>
    tpu.vector_store %arg3[%c0_3, %c0_4], %2 {strides = array<i32>} : memref<128x8xf32, #tpu.memory_space<vmem>>, vector<128x8xf32>,
    return
  }
  func.func @transform_0(%arg0: i32) -> (i32, i32) {
    %c0_i32 = arith.constant 0 : i32
    %c0_i32_0 = arith.constant 0 : i32
    return %arg0, %c0_i32 : i32, i32
  }
  func.func @transform_1(%arg0: i32) -> (i32, i32) {
    %c0_i32 = arith.constant 0 : i32
    %c0_i32_0 = arith.constant 0 : i32
    %c0_i32_1 = arith.constant 0 : i32
    return %c0_i32, %c0_i32_0 : i32, i32
  }
  func.func @transform_2(%arg0: i32) -> (i32, i32) {
    %c0_i32 = arith.constant 0 : i32
    %c0_i32_0 = arith.constant 0 : i32
    return %arg0, %c0_i32 : i32, i32
  }
}

</mosaic_0001>

<llo_original>
// kernel: network_block_nchw.14
$region0: #{network_block_nchw.14}
  #allocation0 [shape = 'u32[]', space=smem, size = 0x4, offset = 0x4, fixed_abs, tag = 'smem constant byte address 0x4 - core index']
  #allocation1 [shape = 'u32[144,128]{1,0:T(1,128)}', space=vmem, size = 0x12000, scoped, tag = 'internal scratch']
  %s0 = inlined_call_operand.vmem [shape: f32[512,4], index: 0, kind: input, shape index: {}]
  %s1 = inlined_call_operand.vmem [shape: f32[1,4], index: 1, kind: input, shape index: {}]
  %s2 = inlined_call_operand.vmem [shape: f32[1,4], index: 2, kind: input, shape index: {}]
  %s3 = inlined_call_operand.vmem [shape: bf16[512,4], index: 3, kind: output, shape index: {}]
  %s4 = sld [smem:[#allocation0]]
  $region22: #{network_block_nchw.14} parent=0
    _
  %s6 = ssub.s32 1, %s4
  %s7 = scalar_select 0, %s6, %s4
  // Predicated region
  $region2: #{network_block_nchw.14} parent=0 // pred_check
    _
  $region3: #{network_block_nchw.14} parent=0 // pred_check_branch
    %9 = sbr.rel (0) target = $region5
  $region4: #{network_block_nchw.14} parent=0 // pred_region
    _
  $region5: #{network_block_nchw.14} parent=0 // pred_fallthru
    _
  // Predicated region
  $region6: #{network_block_nchw.14} parent=0 // pred_check
    _
  $region7: #{network_block_nchw.14} parent=0 // pred_check_branch
    %11 = sbr.rel (0) target = $region9
  $region8: #{network_block_nchw.14} parent=0 // pred_region
    _
  $region9: #{network_block_nchw.14} parent=0 // pred_fallthru
    _
  // Predicated region
  $region10: #{network_block_nchw.14} parent=0 // pred_check
    _
  $region11: #{network_block_nchw.14} parent=0 // pred_check_branch
    %13 = sbr.rel (0) target = $region13
  $region12: #{network_block_nchw.14} parent=0 // pred_region
    _
  $region13: #{network_block_nchw.14} parent=0 // pred_fallthru
    _
  %v14 = vld [vmem:[%s0] sm:$0xff]
  %v15 = vld [vmem:[%s0 + $0x8] sm:$0xff]
  %v16 = vld [vmem:[%s0 + $0x10] sm:$0xff]
  %v17 = vld [vmem:[%s0 + $0x18] sm:$0xff]
  %v18 = vld [vmem:[%s0 + $0x20] sm:$0xff]
  %v19 = vld [vmem:[%s0 + $0x28] sm:$0xff]
  %v20 = vld [vmem:[%s0 + $0x30] sm:$0xff]
  %v21 = vld [vmem:[%s0 + $0x38] sm:$0xff]
  %v22 = vld [vmem:[%s0 + $0x40] sm:$0xff]
  %v23 = vld [vmem:[%s0 + $0x48] sm:$0xff]
  %v24 = vld [vmem:[%s0 + $0x50] sm:$0xff]
  %v25 = vld [vmem:[%s0 + $0x58] sm:$0xff]
  %v26 = vld [vmem:[%s0 + $0x60] sm:$0xff]
  %v27 = vld [vmem:[%s0 + $0x68] sm:$0xff]
  %v28 = vld [vmem:[%s0 + $0x70] sm:$0xff]
  %v29 = vld [vmem:[%s0 + $0x78] sm:$0xff]
  %v30 = vld [vmem:[%s0 + $0x80] sm:$0xff]
  %v31 = vld [vmem:[%s0 + $0x88] sm:$0xff]
  %v32 = vld [vmem:[%s0 + $0x90] sm:$0xff]
  %v33 = vld [vmem:[%s0 + $0x98] sm:$0xff]
  %v34 = vld [vmem:[%s0 + $0xa0] sm:$0xff]
  %v35 = vld [vmem:[%s0 + $0xa8] sm:$0xff]
  %v36 = vld [vmem:[%s0 + $0xb0] sm:$0xff]
  %v37 = vld [vmem:[%s0 + $0xb8] sm:$0xff]
  %v38 = vld [vmem:[%s0 + $0xc0] sm:$0xff]
  %v39 = vld [vmem:[%s0 + $0xc8] sm:$0xff]
  %v40 = vld [vmem:[%s0 + $0xd0] sm:$0xff]
  %v41 = vld [vmem:[%s0 + $0xd8] sm:$0xff]
  %v42 = vld [vmem:[%s0 + $0xe0] sm:$0xff]
  %v43 = vld [vmem:[%s0 + $0xe8] sm:$0xff]
  %v44 = vld [vmem:[%s0 + $0xf0] sm:$0xff]
  %v45 = vld [vmem:[%s0 + $0xf8] sm:$0xff]
  %v46 = vld [vmem:[%s0 + $0x100] sm:$0xff]
  %v47 = vld [vmem:[%s0 + $0x108] sm:$0xff]
  %v48 = vld [vmem:[%s0 + $0x110] sm:$0xff]
  %v49 = vld [vmem:[%s0 + $0x118] sm:$0xff]
  %v50 = vld [vmem:[%s0 + $0x120] sm:$0xff]
  %v51 = vld [vmem:[%s0 + $0x128] sm:$0xff]
  %v52 = vld [vmem:[%s0 + $0x130] sm:$0xff]
  %v53 = vld [vmem:[%s0 + $0x138] sm:$0xff]
  %v54 = vld [vmem:[%s0 + $0x140] sm:$0xff]
  %v55 = vld [vmem:[%s0 + $0x148] sm:$0xff]
  %v56 = vld [vmem:[%s0 + $0x150] sm:$0xff]
  %v57 = vld [vmem:[%s0 + $0x158] sm:$0xff]
  %v58 = vld [vmem:[%s0 + $0x160] sm:$0xff]
  %v59 = vld [vmem:[%s0 + $0x168] sm:$0xff]
  %v60 = vld [vmem:[%s0 + $0x170] sm:$0xff]
  %v61 = vld [vmem:[%s0 + $0x178] sm:$0xff]
  %v62 = vld [vmem:[%s0 + $0x180] sm:$0xff]
  %v63 = vld [vmem:[%s0 + $0x188] sm:$0xff]
  %v64 = vld [vmem:[%s0 + $0x190] sm:$0xff]
  %v65 = vld [vmem:[%s0 + $0x198] sm:$0xff]
  %v66 = vld [vmem:[%s0 + $0x1a0] sm:$0xff]
  %v67 = vld [vmem:[%s0 + $0x1a8] sm:$0xff]
  %v68 = vld [vmem:[%s0 + $0x1b0] sm:$0xff]
  %v69 = vld [vmem:[%s0 + $0x1b8] sm:$0xff]
  %v70 = vld [vmem:[%s0 + $0x1c0] sm:$0xff]
  %v71 = vld [vmem:[%s0 + $0x1c8] sm:$0xff]
  %v72 = vld [vmem:[%s0 + $0x1d0] sm:$0xff]
  %v73 = vld [vmem:[%s0 + $0x1d8] sm:$0xff]
  %v74 = vld [vmem:[%s0 + $0x1e0] sm:$0xff]
  %v75 = vld [vmem:[%s0 + $0x1e8] sm:$0xff]
  %v76 = vld [vmem:[%s0 + $0x1f0] sm:$0xff]
  %v77 = vld [vmem:[%s0 + $0x1f8] sm:$0xff]
  %v78 = vld [vmem:[%s1] sm:$0x1]
  %v80 = vlaneseq
  %v81 = vshrl.u32 %v80, 7
  %v82 = vsub.s32 0, %v81
  %v83 = vrot.slane %v78, %v82
  %v85 = vmul.f32 %v14, %v83
  %v86 = vmul.f32 %v15, %v83
  %v87 = vmul.f32 %v16, %v83
  %v88 = vmul.f32 %v17, %v83
  %v89 = vmul.f32 %v18, %v83
  %v90 = vmul.f32 %v19, %v83
  %v91 = vmul.f32 %v20, %v83
  %v92 = vmul.f32 %v21, %v83
  %v93 = vmul.f32 %v22, %v83
  %v94 = vmul.f32 %v23, %v83
  %v95 = vmul.f32 %v24, %v83
  %v96 = vmul.f32 %v25, %v83
  %v97 = vmul.f32 %v26, %v83
  %v98 = vmul.f32 %v27, %v83
  %v99 = vmul.f32 %v28, %v83
  %v100 = vmul.f32 %v29, %v83
  %v101 = vmul.f32 %v30, %v83
  %v102 = vmul.f32 %v31, %v83
  %v103 = vmul.f32 %v32, %v83
  %v104 = vmul.f32 %v33, %v83
  %v105 = vmul.f32 %v34, %v83
  %v106 = vmul.f32 %v35, %v83
  %v107 = vmul.f32 %v36, %v83
  %v108 = vmul.f32 %v37, %v83
  %v109 = vmul.f32 %v38, %v83
  %v110 = vmul.f32 %v39, %v83
  %v111 = vmul.f32 %v40, %v83
  %v112 = vmul.f32 %v41, %v83
  %v113 = vmul.f32 %v42, %v83
  %v114 = vmul.f32 %v43, %v83
  %v115 = vmul.f32 %v44, %v83
  %v116 = vmul.f32 %v45, %v83
  %v117 = vmul.f32 %v46, %v83
  %v118 = vmul.f32 %v47, %v83
  %v119 = vmul.f32 %v48, %v83
  %v120 = vmul.f32 %v49, %v83
  %v121 = vmul.f32 %v50, %v83
  %v122 = vmul.f32 %v51, %v83
  %v123 = vmul.f32 %v52, %v83
  %v124 = vmul.f32 %v53, %v83
  %v125 = vmul.f32 %v54, %v83
  %v126 = vmul.f32 %v55, %v83
  %v127 = vmul.f32 %v56, %v83
  %v128 = vmul.f32 %v57, %v83
  %v129 = vmul.f32 %v58, %v83
  %v130 = vmul.f32 %v59, %v83
  %v131 = vmul.f32 %v60, %v83
  %v132 = vmul.f32 %v61, %v83
  %v133 = vmul.f32 %v62, %v83
  %v134 = vmul.f32 %v63, %v83
  %v135 = vmul.f32 %v64, %v83
  %v136 = vmul.f32 %v65, %v83
  %v137 = vmul.f32 %v66, %v83
  %v138 = vmul.f32 %v67, %v83
  %v139 = vmul.f32 %v68, %v83
  %v140 = vmul.f32 %v69, %v83
  %v141 = vmul.f32 %v70, %v83
  %v142 = vmul.f32 %v71, %v83
  %v143 = vmul.f32 %v72, %v83
  %v144 = vmul.f32 %v73, %v83
  %v145 = vmul.f32 %v74, %v83
  %v146 = vmul.f32 %v75, %v83
  %v147 = vmul.f32 %v76, %v83
  %v148 = vmul.f32 %v77, %v83
  %v149 = vld [vmem:[%s2] sm:$0x1]
  %v151 = vlaneseq
  %v152 = vshrl.u32 %v151, 7
  %v153 = vsub.s32 0, %v152
  %v154 = vrot.slane %v149, %v153
  %v156 = vadd.f32 %v85, %v154
  %v157 = vadd.f32 %v86, %v154
  %v158 = vadd.f32 %v87, %v154
  %v159 = vadd.f32 %v88, %v154
  %v160 = vadd.f32 %v89, %v154
  %v161 = vadd.f32 %v90, %v154
  %v162 = vadd.f32 %v91, %v154
  %v163 = vadd.f32 %v92, %v154
  %v164 = vadd.f32 %v93, %v154
  %v165 = vadd.f32 %v94, %v154
  %v166 = vadd.f32 %v95, %v154
  %v167 = vadd.f32 %v96, %v154
  %v168 = vadd.f32 %v97, %v154
  %v169 = vadd.f32 %v98, %v154
  %v170 = vadd.f32 %v99, %v154
  %v171 = vadd.f32 %v100, %v154
  %v172 = vadd.f32 %v101, %v154
  %v173 = vadd.f32 %v102, %v154
  %v174 = vadd.f32 %v103, %v154
  %v175 = vadd.f32 %v104, %v154
  %v176 = vadd.f32 %v105, %v154
  %v177 = vadd.f32 %v106, %v154
  %v178 = vadd.f32 %v107, %v154
  %v179 = vadd.f32 %v108, %v154
  %v180 = vadd.f32 %v109, %v154
  %v181 = vadd.f32 %v110, %v154
  %v182 = vadd.f32 %v111, %v154
  %v183 = vadd.f32 %v112, %v154
  %v184 = vadd.f32 %v113, %v154
  %v185 = vadd.f32 %v114, %v154
  %v186 = vadd.f32 %v115, %v154
  %v187 = vadd.f32 %v116, %v154
  %v188 = vadd.f32 %v117, %v154
  %v189 = vadd.f32 %v118, %v154
  %v190 = vadd.f32 %v119, %v154
  %v191 = vadd.f32 %v120, %v154
  %v192 = vadd.f32 %v121, %v154
  %v193 = vadd.f32 %v122, %v154
  %v194 = vadd.f32 %v123, %v154
  %v195 = vadd.f32 %v124, %v154
  %v196 = vadd.f32 %v125, %v154
  %v197 = vadd.f32 %v126, %v154
  %v198 = vadd.f32 %v127, %v154
  %v199 = vadd.f32 %v128, %v154
  %v200 = vadd.f32 %v129, %v154
  %v201 = vadd.f32 %v130, %v154
  %v202 = vadd.f32 %v131, %v154
  %v203 = vadd.f32 %v132, %v154
  %v204 = vadd.f32 %v133, %v154
  %v205 = vadd.f32 %v134, %v154
  %v206 = vadd.f32 %v135, %v154
  %v207 = vadd.f32 %v136, %v154
  %v208 = vadd.f32 %v137, %v154
  %v209 = vadd.f32 %v138, %v154
  %v210 = vadd.f32 %v139, %v154
  %v211 = vadd.f32 %v140, %v154
  %v212 = vadd.f32 %v141, %v154
  %v213 = vadd.f32 %v142, %v154
  %v214 = vadd.f32 %v143, %v154
  %v215 = vadd.f32 %v144, %v154
  %v216 = vadd.f32 %v145, %v154
  %v217 = vadd.f32 %v146, %v154
  %v218 = vadd.f32 %v147, %v154
  %v219 = vadd.f32 %v148, %v154
  %v220 = vmax.f32 %v156, 0.0
  %v221 = vmax.f32 %v157, 0.0
  %v222 = vmax.f32 %v158, 0.0
  %v223 = vmax.f32 %v159, 0.0
  %v224 = vmax.f32 %v160, 0.0
  %v225 = vmax.f32 %v161, 0.0
  %v226 = vmax.f32 %v162, 0.0
  %v227 = vmax.f32 %v163, 0.0
  %v228 = vmax.f32 %v164, 0.0
  %v229 = vmax.f32 %v165, 0.0
  %v230 = vmax.f32 %v166, 0.0
  %v231 = vmax.f32 %v167, 0.0
  %v232 = vmax.f32 %v168, 0.0
  %v233 = vmax.f32 %v169, 0.0
  %v234 = vmax.f32 %v170, 0.0
  %v235 = vmax.f32 %v171, 0.0
  %v236 = vmax.f32 %v172, 0.0
  %v237 = vmax.f32 %v173, 0.0
  %v238 = vmax.f32 %v174, 0.0
  %v239 = vmax.f32 %v175, 0.0
  %v240 = vmax.f32 %v176, 0.0
  %v241 = vmax.f32 %v177, 0.0
  %v242 = vmax.f32 %v178, 0.0
  %v243 = vmax.f32 %v179, 0.0
  %v244 = vmax.f32 %v180, 0.0
  %v245 = vmax.f32 %v181, 0.0
  %v246 = vmax.f32 %v182, 0.0
  %v247 = vmax.f32 %v183, 0.0
  %v248 = vmax.f32 %v184, 0.0
  %v249 = vmax.f32 %v185, 0.0
  %v250 = vmax.f32 %v186, 0.0
  %v251 = vmax.f32 %v187, 0.0
  %v252 = vmax.f32 %v188, 0.0
  %v253 = vmax.f32 %v189, 0.0
  %v254 = vmax.f32 %v190, 0.0
  %v255 = vmax.f32 %v191, 0.0
  %v256 = vmax.f32 %v192, 0.0
  %v257 = vmax.f32 %v193, 0.0
  %v258 = vmax.f32 %v194, 0.0
  %v259 = vmax.f32 %v195, 0.0
  %v260 = vmax.f32 %v196, 0.0
  %v261 = vmax.f32 %v197, 0.0
  %v262 = vmax.f32 %v198, 0.0
  %v263 = vmax.f32 %v199, 0.0
  %v264 = vmax.f32 %v200, 0.0
  %v265 = vmax.f32 %v201, 0.0
  %v266 = vmax.f32 %v202, 0.0
  %v267 = vmax.f32 %v203, 0.0
  %v268 = vmax.f32 %v204, 0.0
  %v269 = vmax.f32 %v205, 0.0
  %v270 = vmax.f32 %v206, 0.0
  %v271 = vmax.f32 %v207, 0.0
  %v272 = vmax.f32 %v208, 0.0
  %v273 = vmax.f32 %v209, 0.0
  %v274 = vmax.f32 %v210, 0.0
  %v275 = vmax.f32 %v211, 0.0
  %v276 = vmax.f32 %v212, 0.0
  %v277 = vmax.f32 %v213, 0.0
  %v278 = vmax.f32 %v214, 0.0
  %v279 = vmax.f32 %v215, 0.0
  %v280 = vmax.f32 %v216, 0.0
  %v281 = vmax.f32 %v217, 0.0
  %v282 = vmax.f32 %v218, 0.0
  %v283 = vmax.f32 %v219, 0.0
  %v284 = vpack.c.bf16 %v221, %v220
  %v285 = vpack.c.bf16 %v223, %v222
  %v286 = vpack.c.bf16 %v225, %v224
  %v287 = vpack.c.bf16 %v227, %v226
  %v288 = vpack.c.bf16 %v229, %v228
  %v289 = vpack.c.bf16 %v231, %v230
  %v290 = vpack.c.bf16 %v233, %v232
  %v291 = vpack.c.bf16 %v235, %v234
  %v292 = vpack.c.bf16 %v237, %v236
  %v293 = vpack.c.bf16 %v239, %v238
  %v294 = vpack.c.bf16 %v241, %v240
  %v295 = vpack.c.bf16 %v243, %v242
  %v296 = vpack.c.bf16 %v245, %v244
  %v297 = vpack.c.bf16 %v247, %v246
  %v298 = vpack.c.bf16 %v249, %v248
  %v299 = vpack.c.bf16 %v251, %v250
  %v300 = vpack.c.bf16 %v253, %v252
  %v301 = vpack.c.bf16 %v255, %v254
  %v302 = vpack.c.bf16 %v257, %v256
  %v303 = vpack.c.bf16 %v259, %v258
  %v304 = vpack.c.bf16 %v261, %v260
  %v305 = vpack.c.bf16 %v263, %v262
  %v306 = vpack.c.bf16 %v265, %v264
  %v307 = vpack.c.bf16 %v267, %v266
  %v308 = vpack.c.bf16 %v269, %v268
  %v309 = vpack.c.bf16 %v271, %v270
  %v310 = vpack.c.bf16 %v273, %v272
  %v311 = vpack.c.bf16 %v275, %v274
  %v312 = vpack.c.bf16 %v277, %v276
  %v313 = vpack.c.bf16 %v279, %v278
  %v314 = vpack.c.bf16 %v281, %v280
  %v315 = vpack.c.bf16 %v283, %v282
  %v348 = vunpack.c.l.b16 %v284
  %v349 = vunpack.c.h.b16 %v284
  %v350 = vunpack.c.l.b16 %v285
  %v351 = vunpack.c.h.b16 %v285
  %v352 = vunpack.c.l.b16 %v286
  %v353 = vunpack.c.h.b16 %v286
  %v354 = vunpack.c.l.b16 %v287
  %v355 = vunpack.c.h.b16 %v287
  %v356 = vunpack.c.l.b16 %v288
  %v357 = vunpack.c.h.b16 %v288
  %v358 = vunpack.c.l.b16 %v289
  %v359 = vunpack.c.h.b16 %v289
  %v360 = vunpack.c.l.b16 %v290
  %v361 = vunpack.c.h.b16 %v290
  %v362 = vunpack.c.l.b16 %v291
  %v363 = vunpack.c.h.b16 %v291
  %v364 = vunpack.c.l.b16 %v292
  %v365 = vunpack.c.h.b16 %v292
  %v366 = vunpack.c.l.b16 %v293
  %v367 = vunpack.c.h.b16 %v293
  %v368 = vunpack.c.l.b16 %v294
  %v369 = vunpack.c.h.b16 %v294
  %v370 = vunpack.c.l.b16 %v295
  %v371 = vunpack.c.h.b16 %v295
  %v372 = vunpack.c.l.b16 %v296
  %v373 = vunpack.c.h.b16 %v296
  %v374 = vunpack.c.l.b16 %v297
  %v375 = vunpack.c.h.b16 %v297
  %v376 = vunpack.c.l.b16 %v298
  %v377 = vunpack.c.h.b16 %v298
  %v378 = vunpack.c.l.b16 %v299
  %v379 = vunpack.c.h.b16 %v299
  %v380 = vunpack.c.l.b16 %v300
  %v381 = vunpack.c.h.b16 %v300
  %v382 = vunpack.c.l.b16 %v301
  %v383 = vunpack.c.h.b16 %v301
  %v384 = vunpack.c.l.b16 %v302
  %v385 = vunpack.c.h.b16 %v302
  %v386 = vunpack.c.l.b16 %v303
  %v387 = vunpack.c.h.b16 %v303
  %v388 = vunpack.c.l.b16 %v304
  %v389 = vunpack.c.h.b16 %v304
  %v390 = vunpack.c.l.b16 %v305
  %v391 = vunpack.c.h.b16 %v305
  %v392 = vunpack.c.l.b16 %v306
  %v393 = vunpack.c.h.b16 %v306
  %v394 = vunpack.c.l.b16 %v307
  %v395 = vunpack.c.h.b16 %v307
  %v396 = vunpack.c.l.b16 %v308
  %v397 = vunpack.c.h.b16 %v308
  %v398 = vunpack.c.l.b16 %v309
  %v399 = vunpack.c.h.b16 %v309
  %v400 = vunpack.c.l.b16 %v310
  %v401 = vunpack.c.h.b16 %v310
  %v402 = vunpack.c.l.b16 %v311
  %v403 = vunpack.c.h.b16 %v311
  %v404 = vunpack.c.l.b16 %v312
  %v405 = vunpack.c.h.b16 %v312
  %v406 = vunpack.c.l.b16 %v313
  %v407 = vunpack.c.h.b16 %v313
  %v408 = vunpack.c.l.b16 %v314
  %v409 = vunpack.c.h.b16 %v314
  %v410 = vunpack.c.l.b16 %v315
  %v411 = vunpack.c.h.b16 %v315
  %v412 = vpack.c.b16 %v348, %v348
  %v413 = vpack.c.b16 %v349, %v349
  %v414 = vpack.c.b16 %v350, %v350
  %v415 = vpack.c.b16 %v351, %v351
  %v416 = vpack.c.b16 %v352, %v352
  %v417 = vpack.c.b16 %v353, %v353
  %v418 = vpack.c.b16 %v354, %v354
  %v419 = vpack.c.b16 %v355, %v355
  %v420 = vpack.c.b16 %v356, %v356
  %v421 = vpack.c.b16 %v357, %v357
  %v422 = vpack.c.b16 %v358, %v358
  %v423 = vpack.c.b16 %v359, %v359
  %v424 = vpack.c.b16 %v360, %v360
  %v425 = vpack.c.b16 %v361, %v361
  %v426 = vpack.c.b16 %v362, %v362
  %v427 = vpack.c.b16 %v363, %v363
  %v428 = vpack.c.b16 %v364, %v364
  %v429 = vpack.c.b16 %v365, %v365
  %v430 = vpack.c.b16 %v366, %v366
  %v431 = vpack.c.b16 %v367, %v367
  %v432 = vpack.c.b16 %v368, %v368
  %v433 = vpack.c.b16 %v369, %v369
  %v434 = vpack.c.b16 %v370, %v370
  %v435 = vpack.c.b16 %v371, %v371
  %v436 = vpack.c.b16 %v372, %v372
  %v437 = vpack.c.b16 %v373, %v373
  %v438 = vpack.c.b16 %v374, %v374
  %v439 = vpack.c.b16 %v375, %v375
  %v440 = vpack.c.b16 %v376, %v376
  %v441 = vpack.c.b16 %v377, %v377
  %v442 = vpack.c.b16 %v378, %v378
  %v443 = vpack.c.b16 %v379, %v379
  %v444 = vpack.c.b16 %v380, %v380
  %v445 = vpack.c.b16 %v381, %v381
  %v446 = vpack.c.b16 %v382, %v382
  %v447 = vpack.c.b16 %v383, %v383
  %v448 = vpack.c.b16 %v384, %v384
  %v449 = vpack.c.b16 %v385, %v385
  %v450 = vpack.c.b16 %v386, %v386
  %v451 = vpack.c.b16 %v387, %v387
  %v452 = vpack.c.b16 %v388, %v388
  %v453 = vpack.c.b16 %v389, %v389
  %v454 = vpack.c.b16 %v390, %v390
  %v455 = vpack.c.b16 %v391, %v391
  %v456 = vpack.c.b16 %v392, %v392
  %v457 = vpack.c.b16 %v393, %v393
  %v458 = vpack.c.b16 %v394, %v394
  %v459 = vpack.c.b16 %v395, %v395
  %v460 = vpack.c.b16 %v396, %v396
  %v461 = vpack.c.b16 %v397, %v397
  %v462 = vpack.c.b16 %v398, %v398
  %v463 = vpack.c.b16 %v399, %v399
  %v464 = vpack.c.b16 %v400, %v400
  %v465 = vpack.c.b16 %v401, %v401
  %v466 = vpack.c.b16 %v402, %v402
  %v467 = vpack.c.b16 %v403, %v403
  %v468 = vpack.c.b16 %v404, %v404
  %v469 = vpack.c.b16 %v405, %v405
  %v470 = vpack.c.b16 %v406, %v406
  %v471 = vpack.c.b16 %v407, %v407
  %v472 = vpack.c.b16 %v408, %v408
  %v473 = vpack.c.b16 %v409, %v409
  %v474 = vpack.c.b16 %v410, %v410
  %v475 = vpack.c.b16 %v411, %v411
  %vm540 = vcmask 27648
  %541 = vst.msk [vmem:[%s3] sm:$0xf] %vm540, %v412
  %542 = vst.msk [vmem:[%s3 + $0x4] sm:$0xf] %vm540, %v413
  %543 = vst.msk [vmem:[%s3 + $0x8] sm:$0xf] %vm540, %v414
  %544 = vst.msk [vmem:[%s3 + $0xc] sm:$0xf] %vm540, %v415
  %545 = vst.msk [vmem:[%s3 + $0x10] sm:$0xf] %vm540, %v416
  %546 = vst.msk [vmem:[%s3 + $0x14] sm:$0xf] %vm540, %v417
  %547 = vst.msk [vmem:[%s3 + $0x18] sm:$0xf] %vm540, %v418
  %548 = vst.msk [vmem:[%s3 + $0x1c] sm:$0xf] %vm540, %v419
  %549 = vst.msk [vmem:[%s3 + $0x20] sm:$0xf] %vm540, %v420
  %550 = vst.msk [vmem:[%s3 + $0x24] sm:$0xf] %vm540, %v421
  %551 = vst.msk [vmem:[%s3 + $0x28] sm:$0xf] %vm540, %v422
  %552 = vst.msk [vmem:[%s3 + $0x2c] sm:$0xf] %vm540, %v423
  %553 = vst.msk [vmem:[%s3 + $0x30] sm:$0xf] %vm540, %v424
  %554 = vst.msk [vmem:[%s3 + $0x34] sm:$0xf] %vm540, %v425
  %555 = vst.msk [vmem:[%s3 + $0x38] sm:$0xf] %vm540, %v426
  %556 = vst.msk [vmem:[%s3 + $0x3c] sm:$0xf] %vm540, %v427
  %557 = vst.msk [vmem:[%s3 + $0x40] sm:$0xf] %vm540, %v428
  %558 = vst.msk [vmem:[%s3 + $0x44] sm:$0xf] %vm540, %v429
  %559 = vst.msk [vmem:[%s3 + $0x48] sm:$0xf] %vm540, %v430
  %560 = vst.msk [vmem:[%s3 + $0x4c] sm:$0xf] %vm540, %v431
  %561 = vst.msk [vmem:[%s3 + $0x50] sm:$0xf] %vm540, %v432
  %562 = vst.msk [vmem:[%s3 + $0x54] sm:$0xf] %vm540, %v433
  %563 = vst.msk [vmem:[%s3 + $0x58] sm:$0xf] %vm540, %v434
  %564 = vst.msk [vmem:[%s3 + $0x5c] sm:$0xf] %vm540, %v435
  %565 = vst.msk [vmem:[%s3 + $0x60] sm:$0xf] %vm540, %v436
  %566 = vst.msk [vmem:[%s3 + $0x64] sm:$0xf] %vm540, %v437
  %567 = vst.msk [vmem:[%s3 + $0x68] sm:$0xf] %vm540, %v438
  %568 = vst.msk [vmem:[%s3 + $0x6c] sm:$0xf] %vm540, %v439
  %569 = vst.msk [vmem:[%s3 + $0x70] sm:$0xf] %vm540, %v440
  %570 = vst.msk [vmem:[%s3 + $0x74] sm:$0xf] %vm540, %v441
  %571 = vst.msk [vmem:[%s3 + $0x78] sm:$0xf] %vm540, %v442
  %572 = vst.msk [vmem:[%s3 + $0x7c] sm:$0xf] %vm540, %v443
  %573 = vst.msk [vmem:[%s3 + $0x80] sm:$0xf] %vm540, %v444
  %574 = vst.msk [vmem:[%s3 + $0x84] sm:$0xf] %vm540, %v445
  %575 = vst.msk [vmem:[%s3 + $0x88] sm:$0xf] %vm540, %v446
  %576 = vst.msk [vmem:[%s3 + $0x8c] sm:$0xf] %vm540, %v447
  %577 = vst.msk [vmem:[%s3 + $0x90] sm:$0xf] %vm540, %v448
  %578 = vst.msk [vmem:[%s3 + $0x94] sm:$0xf] %vm540, %v449
  %579 = vst.msk [vmem:[%s3 + $0x98] sm:$0xf] %vm540, %v450
  %580 = vst.msk [vmem:[%s3 + $0x9c] sm:$0xf] %vm540, %v451
  %581 = vst.msk [vmem:[%s3 + $0xa0] sm:$0xf] %vm540, %v452
  %582 = vst.msk [vmem:[%s3 + $0xa4] sm:$0xf] %vm540, %v453
  %583 = vst.msk [vmem:[%s3 + $0xa8] sm:$0xf] %vm540, %v454
  %584 = vst.msk [vmem:[%s3 + $0xac] sm:$0xf] %vm540, %v455
  %585 = vst.msk [vmem:[%s3 + $0xb0] sm:$0xf] %vm540, %v456
  %586 = vst.msk [vmem:[%s3 + $0xb4] sm:$0xf] %vm540, %v457
  %587 = vst.msk [vmem:[%s3 + $0xb8] sm:$0xf] %vm540, %v458
  %588 = vst.msk [vmem:[%s3 + $0xbc] sm:$0xf] %vm540, %v459
  %589 = vst.msk [vmem:[%s3 + $0xc0] sm:$0xf] %vm540, %v460
  %590 = vst.msk [vmem:[%s3 + $0xc4] sm:$0xf] %vm540, %v461
  %591 = vst.msk [vmem:[%s3 + $0xc8] sm:$0xf] %vm540, %v462
  %592 = vst.msk [vmem:[%s3 + $0xcc] sm:$0xf] %vm540, %v463
  %593 = vst.msk [vmem:[%s3 + $0xd0] sm:$0xf] %vm540, %v464
  %594 = vst.msk [vmem:[%s3 + $0xd4] sm:$0xf] %vm540, %v465
  %595 = vst.msk [vmem:[%s3 + $0xd8] sm:$0xf] %vm540, %v466
  %596 = vst.msk [vmem:[%s3 + $0xdc] sm:$0xf] %vm540, %v467
  %597 = vst.msk [vmem:[%s3 + $0xe0] sm:$0xf] %vm540, %v468
  %598 = vst.msk [vmem:[%s3 + $0xe4] sm:$0xf] %vm540, %v469
  %599 = vst.msk [vmem:[%s3 + $0xe8] sm:$0xf] %vm540, %v470
  %600 = vst.msk [vmem:[%s3 + $0xec] sm:$0xf] %vm540, %v471
  %601 = vst.msk [vmem:[%s3 + $0xf0] sm:$0xf] %vm540, %v472
  %602 = vst.msk [vmem:[%s3 + $0xf4] sm:$0xf] %vm540, %v473
  %603 = vst.msk [vmem:[%s3 + $0xf8] sm:$0xf] %vm540, %v474
  %604 = vst.msk [vmem:[%s3 + $0xfc] sm:$0xf] %vm540, %v475
  // Predicated region
  $region14: #{network_block_nchw.14} parent=0 // pred_check
    _
  $region15: #{network_block_nchw.14} parent=0 // pred_check_branch
    %606 = sbr.rel (0) target = $region17
  $region16: #{network_block_nchw.14} parent=0 // pred_region
    _
  $region17: #{network_block_nchw.14} parent=0 // pred_fallthru
    _
  // Predicated region
  $region18: #{network_block_nchw.14} parent=0 // pred_check
    _
  $region19: #{network_block_nchw.14} parent=0 // pred_check_branch
    %608 = sbr.rel (0) target = $region21
  $region20: #{network_block_nchw.14} parent=0 // pred_region
    _
  $region21: #{network_block_nchw.14} parent=0 // pred_fallthru
    _

// kernel: network_block_nchw.13
$region0: #{network_block_nchw.13}
  #allocation0 [shape = 'u32[]', space=smem, size = 0x4, offset = 0x4, fixed_abs, tag = 'smem constant byte address 0x4 - core index']
  #allocation1 [shape = 'u32[144,128]{1,0:T(1,128)}', space=vmem, size = 0x12000, scoped, tag = 'internal scratch']
  %s0 = inlined_call_operand.vmem [shape: f32[512,4], index: 0, kind: input, shape index: {}]
  %s1 = inlined_call_operand.vmem [shape: f32[8,4], index: 1, kind: output, shape index: {0}]
  %s2 = inlined_call_operand.vmem [shape: f32[8,4], index: 2, kind: output, shape index: {1}]
  %3 = xla_tuple %s1, %s2
  %s4 = sld [smem:[#allocation0]]
  $region26: #{network_block_nchw.13} parent=0
    _
  %s6 = ssub.s32 1, %s4
  %s7 = scalar_select 0, %s6, %s4
  // Predicated region
  $region2: #{network_block_nchw.13} parent=0 // pred_check
    _
  $region3: #{network_block_nchw.13} parent=0 // pred_check_branch
    %9 = sbr.rel (0) target = $region5
  $region4: #{network_block_nchw.13} parent=0 // pred_region
    _
  $region5: #{network_block_nchw.13} parent=0 // pred_fallthru
    _
  %p10 = scmp.eq.s32.totalorder 0, 0
  // Predicated region
  $region6: #{network_block_nchw.13} parent=0 // pred_check
    %p11 = pneg %p10
  $region7: #{network_block_nchw.13} parent=0 // pred_check_branch
    %13 = sbr.rel (%p11) target = $region9
  $region8: #{network_block_nchw.13} parent=0 // pred_region
    %vm14 = vcmask 31744
    %15 = vst.msk [vmem:[%s1] sm:$0xff] %vm14, 0.0
    %16 = vst.msk [vmem:[%s2] sm:$0xff] %vm14, 0.0
  $region9: #{network_block_nchw.13} parent=0 // pred_fallthru
    _
  %v17 = vld [vmem:[%s0] sm:$0xff]
  %v18 = vld [vmem:[%s0 + $0x8] sm:$0xff]
  %v19 = vld [vmem:[%s0 + $0x10] sm:$0xff]
  %v20 = vld [vmem:[%s0 + $0x18] sm:$0xff]
  %v21 = vld [vmem:[%s0 + $0x20] sm:$0xff]
  %v22 = vld [vmem:[%s0 + $0x28] sm:$0xff]
  %v23 = vld [vmem:[%s0 + $0x30] sm:$0xff]
  %v24 = vld [vmem:[%s0 + $0x38] sm:$0xff]
  %v25 = vld [vmem:[%s0 + $0x40] sm:$0xff]
  %v26 = vld [vmem:[%s0 + $0x48] sm:$0xff]
  %v27 = vld [vmem:[%s0 + $0x50] sm:$0xff]
  %v28 = vld [vmem:[%s0 + $0x58] sm:$0xff]
  %v29 = vld [vmem:[%s0 + $0x60] sm:$0xff]
  %v30 = vld [vmem:[%s0 + $0x68] sm:$0xff]
  %v31 = vld [vmem:[%s0 + $0x70] sm:$0xff]
  %v32 = vld [vmem:[%s0 + $0x78] sm:$0xff]
  %v33 = vld [vmem:[%s0 + $0x80] sm:$0xff]
  %v34 = vld [vmem:[%s0 + $0x88] sm:$0xff]
  %v35 = vld [vmem:[%s0 + $0x90] sm:$0xff]
  %v36 = vld [vmem:[%s0 + $0x98] sm:$0xff]
  %v37 = vld [vmem:[%s0 + $0xa0] sm:$0xff]
  %v38 = vld [vmem:[%s0 + $0xa8] sm:$0xff]
  %v39 = vld [vmem:[%s0 + $0xb0] sm:$0xff]
  %v40 = vld [vmem:[%s0 + $0xb8] sm:$0xff]
  %v41 = vld [vmem:[%s0 + $0xc0] sm:$0xff]
  %v42 = vld [vmem:[%s0 + $0xc8] sm:$0xff]
  %v43 = vld [vmem:[%s0 + $0xd0] sm:$0xff]
  %v44 = vld [vmem:[%s0 + $0xd8] sm:$0xff]
  %v45 = vld [vmem:[%s0 + $0xe0] sm:$0xff]
  %v46 = vld [vmem:[%s0 + $0xe8] sm:$0xff]
  %v47 = vld [vmem:[%s0 + $0xf0] sm:$0xff]
  %v48 = vld [vmem:[%s0 + $0xf8] sm:$0xff]
  %v49 = vld [vmem:[%s0 + $0x100] sm:$0xff]
  %v50 = vld [vmem:[%s0 + $0x108] sm:$0xff]
  %v51 = vld [vmem:[%s0 + $0x110] sm:$0xff]
  %v52 = vld [vmem:[%s0 + $0x118] sm:$0xff]
  %v53 = vld [vmem:[%s0 + $0x120] sm:$0xff]
  %v54 = vld [vmem:[%s0 + $0x128] sm:$0xff]
  %v55 = vld [vmem:[%s0 + $0x130] sm:$0xff]
  %v56 = vld [vmem:[%s0 + $0x138] sm:$0xff]
  %v57 = vld [vmem:[%s0 + $0x140] sm:$0xff]
  %v58 = vld [vmem:[%s0 + $0x148] sm:$0xff]
  %v59 = vld [vmem:[%s0 + $0x150] sm:$0xff]
  %v60 = vld [vmem:[%s0 + $0x158] sm:$0xff]
  %v61 = vld [vmem:[%s0 + $0x160] sm:$0xff]
  %v62 = vld [vmem:[%s0 + $0x168] sm:$0xff]
  %v63 = vld [vmem:[%s0 + $0x170] sm:$0xff]
  %v64 = vld [vmem:[%s0 + $0x178] sm:$0xff]
  %v65 = vld [vmem:[%s0 + $0x180] sm:$0xff]
  %v66 = vld [vmem:[%s0 + $0x188] sm:$0xff]
  %v67 = vld [vmem:[%s0 + $0x190] sm:$0xff]
  %v68 = vld [vmem:[%s0 + $0x198] sm:$0xff]
  %v69 = vld [vmem:[%s0 + $0x1a0] sm:$0xff]
  %v70 = vld [vmem:[%s0 + $0x1a8] sm:$0xff]
  %v71 = vld [vmem:[%s0 + $0x1b0] sm:$0xff]
  %v72 = vld [vmem:[%s0 + $0x1b8] sm:$0xff]
  %v73 = vld [vmem:[%s0 + $0x1c0] sm:$0xff]
  %v74 = vld [vmem:[%s0 + $0x1c8] sm:$0xff]
  %v75 = vld [vmem:[%s0 + $0x1d0] sm:$0xff]
  %v76 = vld [vmem:[%s0 + $0x1d8] sm:$0xff]
  %v77 = vld [vmem:[%s0 + $0x1e0] sm:$0xff]
  %v78 = vld [vmem:[%s0 + $0x1e8] sm:$0xff]
  %v79 = vld [vmem:[%s0 + $0x1f0] sm:$0xff]
  %v80 = vld [vmem:[%s0 + $0x1f8] sm:$0xff]
  %v81 = vld [vmem:[%s1] sm:$0xff]
  %vm82 = vcmask 31744
  %v83 = vsel %vm82, %v17, 0.0
  %v84 = vsel %vm82, %v18, 0.0
  %v85 = vadd.f32 %v83, %v84
  %v86 = vsel %vm82, %v19, 0.0
  %v87 = vadd.f32 %v85, %v86
  %v88 = vsel %vm82, %v20, 0.0
  %v89 = vadd.f32 %v87, %v88
  %v90 = vsel %vm82, %v21, 0.0
  %v91 = vadd.f32 %v89, %v90
  %v92 = vsel %vm82, %v22, 0.0
  %v93 = vadd.f32 %v91, %v92
  %v94 = vsel %vm82, %v23, 0.0
  %v95 = vadd.f32 %v93, %v94
  %v96 = vsel %vm82, %v24, 0.0
  %v97 = vadd.f32 %v95, %v96
  %v98 = vsel %vm82, %v25, 0.0
  %v99 = vadd.f32 %v97, %v98
  %v100 = vsel %vm82, %v26, 0.0
  %v101 = vadd.f32 %v99, %v100
  %v102 = vsel %vm82, %v27, 0.0
  %v103 = vadd.f32 %v101, %v102
  %v104 = vsel %vm82, %v28, 0.0
  %v105 = vadd.f32 %v103, %v104
  %v106 = vsel %vm82, %v29, 0.0
  %v107 = vadd.f32 %v105, %v106
  %v108 = vsel %vm82, %v30, 0.0
  %v109 = vadd.f32 %v107, %v108
  %v110 = vsel %vm82, %v31, 0.0
  %v111 = vadd.f32 %v109, %v110
  %v112 = vsel %vm82, %v32, 0.0
  %v113 = vadd.f32 %v111, %v112
  %v114 = vsel %vm82, %v33, 0.0
  %v115 = vadd.f32 %v113, %v114
  %v116 = vsel %vm82, %v34, 0.0
  %v117 = vadd.f32 %v115, %v116
  %v118 = vsel %vm82, %v35, 0.0
  %v119 = vadd.f32 %v117, %v118
  %v120 = vsel %vm82, %v36, 0.0
  %v121 = vadd.f32 %v119, %v120
  %v122 = vsel %vm82, %v37, 0.0
  %v123 = vadd.f32 %v121, %v122
  %v124 = vsel %vm82, %v38, 0.0
  %v125 = vadd.f32 %v123, %v124
  %v126 = vsel %vm82, %v39, 0.0
  %v127 = vadd.f32 %v125, %v126
  %v128 = vsel %vm82, %v40, 0.0
  %v129 = vadd.f32 %v127, %v128
  %v130 = vsel %vm82, %v41, 0.0
  %v131 = vadd.f32 %v129, %v130
  %v132 = vsel %vm82, %v42, 0.0
  %v133 = vadd.f32 %v131, %v132
  %v134 = vsel %vm82, %v43, 0.0
  %v135 = vadd.f32 %v133, %v134
  %v136 = vsel %vm82, %v44, 0.0
  %v137 = vadd.f32 %v135, %v136
  %v138 = vsel %vm82, %v45, 0.0
  %v139 = vadd.f32 %v137, %v138
  %v140 = vsel %vm82, %v46, 0.0
  %v141 = vadd.f32 %v139, %v140
  %v142 = vsel %vm82, %v47, 0.0
  %v143 = vadd.f32 %v141, %v142
  %v144 = vsel %vm82, %v48, 0.0
  %v145 = vadd.f32 %v143, %v144
  %v146 = vsel %vm82, %v49, 0.0
  %v147 = vadd.f32 %v145, %v146
  %v148 = vsel %vm82, %v50, 0.0
  %v149 = vadd.f32 %v147, %v148
  %v150 = vsel %vm82, %v51, 0.0
  %v151 = vadd.f32 %v149, %v150
  %v152 = vsel %vm82, %v52, 0.0
  %v153 = vadd.f32 %v151, %v152
  %v154 = vsel %vm82, %v53, 0.0
  %v155 = vadd.f32 %v153, %v154
  %v156 = vsel %vm82, %v54, 0.0
  %v157 = vadd.f32 %v155, %v156
  %v158 = vsel %vm82, %v55, 0.0
  %v159 = vadd.f32 %v157, %v158
  %v160 = vsel %vm82, %v56, 0.0
  %v161 = vadd.f32 %v159, %v160
  %v162 = vsel %vm82, %v57, 0.0
  %v163 = vadd.f32 %v161, %v162
  %v164 = vsel %vm82, %v58, 0.0
  %v165 = vadd.f32 %v163, %v164
  %v166 = vsel %vm82, %v59, 0.0
  %v167 = vadd.f32 %v165, %v166
  %v168 = vsel %vm82, %v60, 0.0
  %v169 = vadd.f32 %v167, %v168
  %v170 = vsel %vm82, %v61, 0.0
  %v171 = vadd.f32 %v169, %v170
  %v172 = vsel %vm82, %v62, 0.0
  %v173 = vadd.f32 %v171, %v172
  %v174 = vsel %vm82, %v63, 0.0
  %v175 = vadd.f32 %v173, %v174
  %v176 = vsel %vm82, %v64, 0.0
  %v177 = vadd.f32 %v175, %v176
  %v178 = vsel %vm82, %v65, 0.0
  %v179 = vadd.f32 %v177, %v178
  %v180 = vsel %vm82, %v66, 0.0
  %v181 = vadd.f32 %v179, %v180
  %v182 = vsel %vm82, %v67, 0.0
  %v183 = vadd.f32 %v181, %v182
  %v184 = vsel %vm82, %v68, 0.0
  %v185 = vadd.f32 %v183, %v184
  %v186 = vsel %vm82, %v69, 0.0
  %v187 = vadd.f32 %v185, %v186
  %v188 = vsel %vm82, %v70, 0.0
  %v189 = vadd.f32 %v187, %v188
  %v190 = vsel %vm82, %v71, 0.0
  %v191 = vadd.f32 %v189, %v190
  %v192 = vsel %vm82, %v72, 0.0
  %v193 = vadd.f32 %v191, %v192
  %v194 = vsel %vm82, %v73, 0.0
  %v195 = vadd.f32 %v193, %v194
  %v196 = vsel %vm82, %v74, 0.0
  %v197 = vadd.f32 %v195, %v196
  %v198 = vsel %vm82, %v75, 0.0
  %v199 = vadd.f32 %v197, %v198
  %v200 = vsel %vm82, %v76, 0.0
  %v201 = vadd.f32 %v199, %v200
  %v202 = vsel %vm82, %v77, 0.0
  %v203 = vadd.f32 %v201, %v202
  %v204 = vsel %vm82, %v78, 0.0
  %v205 = vadd.f32 %v203, %v204
  %v206 = vsel %vm82, %v79, 0.0
  %v207 = vadd.f32 %v205, %v206
  %v208 = vsel %vm82, %v80, 0.0
  %v209 = vadd.f32 %v207, %v208
  %v210 = vadd.f32 %v81, %v209
  %211 = vst.msk [vmem:[%s1] sm:$0xff] %vm82, %v210
  %v212 = vld [vmem:[%s2] sm:$0xff]
  %v213 = vmul.f32 %v17, %v17
  %v214 = vmul.f32 %v18, %v18
  %v215 = vmul.f32 %v19, %v19
  %v216 = vmul.f32 %v20, %v20
  %v217 = vmul.f32 %v21, %v21
  %v218 = vmul.f32 %v22, %v22
  %v219 = vmul.f32 %v23, %v23
  %v220 = vmul.f32 %v24, %v24
  %v221 = vmul.f32 %v25, %v25
  %v222 = vmul.f32 %v26, %v26
  %v223 = vmul.f32 %v27, %v27
  %v224 = vmul.f32 %v28, %v28
  %v225 = vmul.f32 %v29, %v29
  %v226 = vmul.f32 %v30, %v30
  %v227 = vmul.f32 %v31, %v31
  %v228 = vmul.f32 %v32, %v32
  %v229 = vmul.f32 %v33, %v33
  %v230 = vmul.f32 %v34, %v34
  %v231 = vmul.f32 %v35, %v35
  %v232 = vmul.f32 %v36, %v36
  %v233 = vmul.f32 %v37, %v37
  %v234 = vmul.f32 %v38, %v38
  %v235 = vmul.f32 %v39, %v39
  %v236 = vmul.f32 %v40, %v40
  %v237 = vmul.f32 %v41, %v41
  %v238 = vmul.f32 %v42, %v42
  %v239 = vmul.f32 %v43, %v43
  %v240 = vmul.f32 %v44, %v44
  %v241 = vmul.f32 %v45, %v45
  %v242 = vmul.f32 %v46, %v46
  %v243 = vmul.f32 %v47, %v47
  %v244 = vmul.f32 %v48, %v48
  %v245 = vmul.f32 %v49, %v49
  %v246 = vmul.f32 %v50, %v50
  %v247 = vmul.f32 %v51, %v51
  %v248 = vmul.f32 %v52, %v52
  %v249 = vmul.f32 %v53, %v53
  %v250 = vmul.f32 %v54, %v54
  %v251 = vmul.f32 %v55, %v55
  %v252 = vmul.f32 %v56, %v56
  %v253 = vmul.f32 %v57, %v57
  %v254 = vmul.f32 %v58, %v58
  %v255 = vmul.f32 %v59, %v59
  %v256 = vmul.f32 %v60, %v60
  %v257 = vmul.f32 %v61, %v61
  %v258 = vmul.f32 %v62, %v62
  %v259 = vmul.f32 %v63, %v63
  %v260 = vmul.f32 %v64, %v64
  %v261 = vmul.f32 %v65, %v65
  %v262 = vmul.f32 %v66, %v66
  %v263 = vmul.f32 %v67, %v67
  %v264 = vmul.f32 %v68, %v68
  %v265 = vmul.f32 %v69, %v69
  %v266 = vmul.f32 %v70, %v70
  %v267 = vmul.f32 %v71, %v71
  %v268 = vmul.f32 %v72, %v72
  %v269 = vmul.f32 %v73, %v73
  %v270 = vmul.f32 %v74, %v74
  %v271 = vmul.f32 %v75, %v75
  %v272 = vmul.f32 %v76, %v76
  %v273 = vmul.f32 %v77, %v77
  %v274 = vmul.f32 %v78, %v78
  %v275 = vmul.f32 %v79, %v79
  %v276 = vmul.f32 %v80, %v80
  %v277 = vsel %vm82, %v213, 0.0
  %v278 = vsel %vm82, %v214, 0.0
  %v279 = vadd.f32 %v277, %v278
  %v280 = vsel %vm82, %v215, 0.0
  %v281 = vadd.f32 %v279, %v280
  %v282 = vsel %vm82, %v216, 0.0
  %v283 = vadd.f32 %v281, %v282
  %v284 = vsel %vm82, %v217, 0.0
  %v285 = vadd.f32 %v283, %v284
  %v286 = vsel %vm82, %v218, 0.0
  %v287 = vadd.f32 %v285, %v286
  %v288 = vsel %vm82, %v219, 0.0
  %v289 = vadd.f32 %v287, %v288
  %v290 = vsel %vm82, %v220, 0.0
  %v291 = vadd.f32 %v289, %v290
  %v292 = vsel %vm82, %v221, 0.0
  %v293 = vadd.f32 %v291, %v292
  %v294 = vsel %vm82, %v222, 0.0
  %v295 = vadd.f32 %v293, %v294
  %v296 = vsel %vm82, %v223, 0.0
  %v297 = vadd.f32 %v295, %v296
  %v298 = vsel %vm82, %v224, 0.0
  %v299 = vadd.f32 %v297, %v298
  %v300 = vsel %vm82, %v225, 0.0
  %v301 = vadd.f32 %v299, %v300
  %v302 = vsel %vm82, %v226, 0.0
  %v303 = vadd.f32 %v301, %v302
  %v304 = vsel %vm82, %v227, 0.0
  %v305 = vadd.f32 %v303, %v304
  %v306 = vsel %vm82, %v228, 0.0
  %v307 = vadd.f32 %v305, %v306
  %v308 = vsel %vm82, %v229, 0.0
  %v309 = vadd.f32 %v307, %v308
  %v310 = vsel %vm82, %v230, 0.0
  %v311 = vadd.f32 %v309, %v310
  %v312 = vsel %vm82, %v231, 0.0
  %v313 = vadd.f32 %v311, %v312
  %v314 = vsel %vm82, %v232, 0.0
  %v315 = vadd.f32 %v313, %v314
  %v316 = vsel %vm82, %v233, 0.0
  %v317 = vadd.f32 %v315, %v316
  %v318 = vsel %vm82, %v234, 0.0
  %v319 = vadd.f32 %v317, %v318
  %v320 = vsel %vm82, %v235, 0.0
  %v321 = vadd.f32 %v319, %v320
  %v322 = vsel %vm82, %v236, 0.0
  %v323 = vadd.f32 %v321, %v322
  %v324 = vsel %vm82, %v237, 0.0
  %v325 = vadd.f32 %v323, %v324
  %v326 = vsel %vm82, %v238, 0.0
  %v327 = vadd.f32 %v325, %v326
  %v328 = vsel %vm82, %v239, 0.0
  %v329 = vadd.f32 %v327, %v328
  %v330 = vsel %vm82, %v240, 0.0
  %v331 = vadd.f32 %v329, %v330
  %v332 = vsel %vm82, %v241, 0.0
  %v333 = vadd.f32 %v331, %v332
  %v334 = vsel %vm82, %v242, 0.0
  %v335 = vadd.f32 %v333, %v334
  %v336 = vsel %vm82, %v243, 0.0
  %v337 = vadd.f32 %v335, %v336
  %v338 = vsel %vm82, %v244, 0.0
  %v339 = vadd.f32 %v337, %v338
  %v340 = vsel %vm82, %v245, 0.0
  %v341 = vadd.f32 %v339, %v340
  %v342 = vsel %vm82, %v246, 0.0
  %v343 = vadd.f32 %v341, %v342
  %v344 = vsel %vm82, %v247, 0.0
  %v345 = vadd.f32 %v343, %v344
  %v346 = vsel %vm82, %v248, 0.0
  %v347 = vadd.f32 %v345, %v346
  %v348 = vsel %vm82, %v249, 0.0
  %v349 = vadd.f32 %v347, %v348
  %v350 = vsel %vm82, %v250, 0.0
  %v351 = vadd.f32 %v349, %v350
  %v352 = vsel %vm82, %v251, 0.0
  %v353 = vadd.f32 %v351, %v352
  %v354 = vsel %vm82, %v252, 0.0
  %v355 = vadd.f32 %v353, %v354
  %v356 = vsel %vm82, %v253, 0.0
  %v357 = vadd.f32 %v355, %v356
  %v358 = vsel %vm82, %v254, 0.0
  %v359 = vadd.f32 %v357, %v358
  %v360 = vsel %vm82, %v255, 0.0
  %v361 = vadd.f32 %v359, %v360
  %v362 = vsel %vm82, %v256, 0.0
  %v363 = vadd.f32 %v361, %v362
  %v364 = vsel %vm82, %v257, 0.0
  %v365 = vadd.f32 %v363, %v364
  %v366 = vsel %vm82, %v258, 0.0
  %v367 = vadd.f32 %v365, %v366
  %v368 = vsel %vm82, %v259, 0.0
  %v369 = vadd.f32 %v367, %v368
  %v370 = vsel %vm82, %v260, 0.0
  %v371 = vadd.f32 %v369, %v370
  %v372 = vsel %vm82, %v261, 0.0
  %v373 = vadd.f32 %v371, %v372
  %v374 = vsel %vm82, %v262, 0.0
  %v375 = vadd.f32 %v373, %v374
  %v376 = vsel %vm82, %v263, 0.0
  %v377 = vadd.f32 %v375, %v376
  %v378 = vsel %vm82, %v264, 0.0
  %v379 = vadd.f32 %v377, %v378
  %v380 = vsel %vm82, %v265, 0.0
  %v381 = vadd.f32 %v379, %v380
  %v382 = vsel %vm82, %v266, 0.0
  %v383 = vadd.f32 %v381, %v382
  %v384 = vsel %vm82, %v267, 0.0
  %v385 = vadd.f32 %v383, %v384
  %v386 = vsel %vm82, %v268, 0.0
  %v387 = vadd.f32 %v385, %v386
  %v388 = vsel %vm82, %v269, 0.0
  %v389 = vadd.f32 %v387, %v388
  %v390 = vsel %vm82, %v270, 0.0
  %v391 = vadd.f32 %v389, %v390
  %v392 = vsel %vm82, %v271, 0.0
  %v393 = vadd.f32 %v391, %v392
  %v394 = vsel %vm82, %v272, 0.0
  %v395 = vadd.f32 %v393, %v394
  %v396 = vsel %vm82, %v273, 0.0
  %v397 = vadd.f32 %v395, %v396
  %v398 = vsel %vm82, %v274, 0.0
  %v399 = vadd.f32 %v397, %v398
  %v400 = vsel %vm82, %v275, 0.0
  %v401 = vadd.f32 %v399, %v400
  %v402 = vsel %vm82, %v276, 0.0
  %v403 = vadd.f32 %v401, %v402
  %v404 = vadd.f32 %v212, %v403
  %405 = vst.msk [vmem:[%s2] sm:$0xff] %vm82, %v404
  // Predicated region
  $region10: #{network_block_nchw.13} parent=0 // pred_check
    _
  $region11: #{network_block_nchw.13} parent=0 // pred_check_branch
    %407 = sbr.rel (0) target = $region13
  $region12: #{network_block_nchw.13} parent=0 // pred_region
    _
  $region13: #{network_block_nchw.13} parent=0 // pred_fallthru
    _
  // Predicated region
  $region14: #{network_block_nchw.13} parent=0 // pred_check
    _
  $region15: #{network_block_nchw.13} parent=0 // pred_check_branch
    %409 = sbr.rel (0) target = $region17
  $region16: #{network_block_nchw.13} parent=0 // pred_region
    _
  $region17: #{network_block_nchw.13} parent=0 // pred_fallthru
    _
  // Predicated region
  $region18: #{network_block_nchw.13} parent=0 // pred_check
    _
  $region19: #{network_block_nchw.13} parent=0 // pred_check_branch
    %411 = sbr.rel (0) target = $region21
  $region20: #{network_block_nchw.13} parent=0 // pred_region
    _
  $region21: #{network_block_nchw.13} parent=0 // pred_fallthru
    _
  // Predicated region
  $region22: #{network_block_nchw.13} parent=0 // pred_check
    _
  $region23: #{network_block_nchw.13} parent=0 // pred_check_branch
    %413 = sbr.rel (0) target = $region25
  $region24: #{network_block_nchw.13} parent=0 // pred_region
    _
  $region25: #{network_block_nchw.13} parent=0 // pred_fallthru
    _

// kernel: network_block_nchw.16
$region0: #{network_block_nchw.16}
  #allocation0 [shape = 'u32[]', space=smem, size = 0x4, offset = 0x4, fixed_abs, tag = 'smem constant byte address 0x4 - core index']
  #allocation1 [shape = 'u32[144,128]{1,0:T(1,128)}', space=vmem, size = 0x12000, scoped, tag = 'internal scratch']
  %s0 = inlined_call_operand.vmem [shape: f32[128,8], index: 0, kind: input, shape index: {}]
  %s1 = inlined_call_operand.vmem [shape: f32[8,8], index: 1, kind: output, shape index: {0}]
  %s2 = inlined_call_operand.vmem [shape: f32[8,8], index: 2, kind: output, shape index: {1}]
  %3 = xla_tuple %s1, %s2
  %s4 = sld [smem:[#allocation0]]
  $region26: #{network_block_nchw.16} parent=0
    _
  %s6 = ssub.s32 1, %s4
  %s7 = scalar_select 0, %s6, %s4
  // Predicated region
  $region2: #{network_block_nchw.16} parent=0 // pred_check
    _
  $region3: #{network_block_nchw.16} parent=0 // pred_check_branch
    %9 = sbr.rel (0) target = $region5
  $region4: #{network_block_nchw.16} parent=0 // pred_region
    _
  $region5: #{network_block_nchw.16} parent=0 // pred_fallthru
    _
  %p10 = scmp.eq.s32.totalorder 0, 0
  // Predicated region
  $region6: #{network_block_nchw.16} parent=0 // pred_check
    %p11 = pneg %p10
  $region7: #{network_block_nchw.16} parent=0 // pred_check_branch
    %13 = sbr.rel (%p11) target = $region9
  $region8: #{network_block_nchw.16} parent=0 // pred_region
    %vm14 = vcmask 64512
    %15 = vst.msk [vmem:[%s1] sm:$0xff] %vm14, 0.0
    %16 = vst.msk [vmem:[%s2] sm:$0xff] %vm14, 0.0
  $region9: #{network_block_nchw.16} parent=0 // pred_fallthru
    _
  %v17 = vld [vmem:[%s0] sm:$0xff]
  %v18 = vld [vmem:[%s0 + $0x8] sm:$0xff]
  %v19 = vld [vmem:[%s0 + $0x10] sm:$0xff]
  %v20 = vld [vmem:[%s0 + $0x18] sm:$0xff]
  %v21 = vld [vmem:[%s0 + $0x20] sm:$0xff]
  %v22 = vld [vmem:[%s0 + $0x28] sm:$0xff]
  %v23 = vld [vmem:[%s0 + $0x30] sm:$0xff]
  %v24 = vld [vmem:[%s0 + $0x38] sm:$0xff]
  %v25 = vld [vmem:[%s0 + $0x40] sm:$0xff]
  %v26 = vld [vmem:[%s0 + $0x48] sm:$0xff]
  %v27 = vld [vmem:[%s0 + $0x50] sm:$0xff]
  %v28 = vld [vmem:[%s0 + $0x58] sm:$0xff]
  %v29 = vld [vmem:[%s0 + $0x60] sm:$0xff]
  %v30 = vld [vmem:[%s0 + $0x68] sm:$0xff]
  %v31 = vld [vmem:[%s0 + $0x70] sm:$0xff]
  %v32 = vld [vmem:[%s0 + $0x78] sm:$0xff]
  %v33 = vld [vmem:[%s1] sm:$0xff]
  %vm34 = vcmask 64512
  %v35 = vsel %vm34, %v17, 0.0
  %v36 = vsel %vm34, %v18, 0.0
  %v37 = vadd.f32 %v35, %v36
  %v38 = vsel %vm34, %v19, 0.0
  %v39 = vadd.f32 %v37, %v38
  %v40 = vsel %vm34, %v20, 0.0
  %v41 = vadd.f32 %v39, %v40
  %v42 = vsel %vm34, %v21, 0.0
  %v43 = vadd.f32 %v41, %v42
  %v44 = vsel %vm34, %v22, 0.0
  %v45 = vadd.f32 %v43, %v44
  %v46 = vsel %vm34, %v23, 0.0
  %v47 = vadd.f32 %v45, %v46
  %v48 = vsel %vm34, %v24, 0.0
  %v49 = vadd.f32 %v47, %v48
  %v50 = vsel %vm34, %v25, 0.0
  %v51 = vadd.f32 %v49, %v50
  %v52 = vsel %vm34, %v26, 0.0
  %v53 = vadd.f32 %v51, %v52
  %v54 = vsel %vm34, %v27, 0.0
  %v55 = vadd.f32 %v53, %v54
  %v56 = vsel %vm34, %v28, 0.0
  %v57 = vadd.f32 %v55, %v56
  %v58 = vsel %vm34, %v29, 0.0
  %v59 = vadd.f32 %v57, %v58
  %v60 = vsel %vm34, %v30, 0.0
  %v61 = vadd.f32 %v59, %v60
  %v62 = vsel %vm34, %v31, 0.0
  %v63 = vadd.f32 %v61, %v62
  %v64 = vsel %vm34, %v32, 0.0
  %v65 = vadd.f32 %v63, %v64
  %v66 = vadd.f32 %v33, %v65
  %67 = vst.msk [vmem:[%s1] sm:$0xff] %vm34, %v66
  %v68 = vld [vmem:[%s2] sm:$0xff]
  %v69 = vmul.f32 %v17, %v17
  %v70 = vmul.f32 %v18, %v18
  %v71 = vmul.f32 %v19, %v19
  %v72 = vmul.f32 %v20, %v20
  %v73 = vmul.f32 %v21, %v21
  %v74 = vmul.f32 %v22, %v22
  %v75 = vmul.f32 %v23, %v23
  %v76 = vmul.f32 %v24, %v24
  %v77 = vmul.f32 %v25, %v25
  %v78 = vmul.f32 %v26, %v26
  %v79 = vmul.f32 %v27, %v27
  %v80 = vmul.f32 %v28, %v28
  %v81 = vmul.f32 %v29, %v29
  %v82 = vmul.f32 %v30, %v30
  %v83 = vmul.f32 %v31, %v31
  %v84 = vmul.f32 %v32, %v32
  %v85 = vsel %vm34, %v69, 0.0
  %v86 = vsel %vm34, %v70, 0.0
  %v87 = vadd.f32 %v85, %v86
  %v88 = vsel %vm34, %v71, 0.0
  %v89 = vadd.f32 %v87, %v88
  %v90 = vsel %vm34, %v72, 0.0
  %v91 = vadd.f32 %v89, %v90
  %v92 = vsel %vm34, %v73, 0.0
  %v93 = vadd.f32 %v91, %v92
  %v94 = vsel %vm34, %v74, 0.0
  %v95 = vadd.f32 %v93, %v94
  %v96 = vsel %vm34, %v75, 0.0
  %v97 = vadd.f32 %v95, %v96
  %v98 = vsel %vm34, %v76, 0.0
  %v99 = vadd.f32 %v97, %v98
  %v100 = vsel %vm34, %v77, 0.0
  %v101 = vadd.f32 %v99, %v100
  %v102 = vsel %vm34, %v78, 0.0
  %v103 = vadd.f32 %v101, %v102
  %v104 = vsel %vm34, %v79, 0.0
  %v105 = vadd.f32 %v103, %v104
  %v106 = vsel %vm34, %v80, 0.0
  %v107 = vadd.f32 %v105, %v106
  %v108 = vsel %vm34, %v81, 0.0
  %v109 = vadd.f32 %v107, %v108
  %v110 = vsel %vm34, %v82, 0.0
  %v111 = vadd.f32 %v109, %v110
  %v112 = vsel %vm34, %v83, 0.0
  %v113 = vadd.f32 %v111, %v112
  %v114 = vsel %vm34, %v84, 0.0
  %v115 = vadd.f32 %v113, %v114
  %v116 = vadd.f32 %v68, %v115
  %117 = vst.msk [vmem:[%s2] sm:$0xff] %vm34, %v116
  // Predicated region
  $region10: #{network_block_nchw.16} parent=0 // pred_check
    _
  $region11: #{network_block_nchw.16} parent=0 // pred_check_branch
    %119 = sbr.rel (0) target = $region13
  $region12: #{network_block_nchw.16} parent=0 // pred_region
    _
  $region13: #{network_block_nchw.16} parent=0 // pred_fallthru
    _
  // Predicated region
  $region14: #{network_block_nchw.16} parent=0 // pred_check
    _
  $region15: #{network_block_nchw.16} parent=0 // pred_check_branch
    %121 = sbr.rel (0) target = $region17
  $region16: #{network_block_nchw.16} parent=0 // pred_region
    _
  $region17: #{network_block_nchw.16} parent=0 // pred_fallthru
    _
  // Predicated region
  $region18: #{network_block_nchw.16} parent=0 // pred_check
    _
  $region19: #{network_block_nchw.16} parent=0 // pred_check_branch
    %123 = sbr.rel (0) target = $region21
  $region20: #{network_block_nchw.16} parent=0 // pred_region
    _
  $region21: #{network_block_nchw.16} parent=0 // pred_fallthru
    _
  // Predicated region
  $region22: #{network_block_nchw.16} parent=0 // pred_check
    _
  $region23: #{network_block_nchw.16} parent=0 // pred_check_branch
    %125 = sbr.rel (0) target = $region25
  $region24: #{network_block_nchw.16} parent=0 // pred_region
    _
  $region25: #{network_block_nchw.16} parent=0 // pred_fallthru
    _

// kernel: network_block_nchw.18
$region0: #{network_block_nchw.18}
  #allocation0 [shape = 'u32[]', space=smem, size = 0x4, offset = 0x4, fixed_abs, tag = 'smem constant byte address 0x4 - core index']
  #allocation1 [shape = 'u32[144,128]{1,0:T(1,128)}', space=vmem, size = 0x12000, scoped, tag = 'internal scratch']
  %s0 = inlined_call_operand.vmem [shape: bf16[128,4], index: 0, kind: input, shape index: {}]
  %s1 = inlined_call_operand.vmem [shape: bf16[4,8], index: 1, kind: input, shape index: {}]
  %s2 = inlined_call_operand.vmem [shape: f32[128,8], index: 2, kind: output, shape index: {}]
  %s3 = sld [smem:[#allocation0]]
  $region18: #{network_block_nchw.18} parent=0
    _
  %s5 = ssub.s32 1, %s3
  %s6 = scalar_select 0, %s5, %s3
  // Predicated region
  $region2: #{network_block_nchw.18} parent=0 // pred_check
    _
  $region3: #{network_block_nchw.18} parent=0 // pred_check_branch
    %8 = sbr.rel (0) target = $region5
  $region4: #{network_block_nchw.18} parent=0 // pred_region
    _
  $region5: #{network_block_nchw.18} parent=0 // pred_fallthru
    _
  // Predicated region
  $region6: #{network_block_nchw.18} parent=0 // pred_check
    _
  $region7: #{network_block_nchw.18} parent=0 // pred_check_branch
    %10 = sbr.rel (0) target = $region9
  $region8: #{network_block_nchw.18} parent=0 // pred_region
    _
  $region9: #{network_block_nchw.18} parent=0 // pred_fallthru
    _
  %v12 = vld [vmem:[%s0] sm:$0xf]
  %v13 = vld [vmem:[%s0 + $0x4] sm:$0xf]
  %v14 = vld [vmem:[%s0 + $0x8] sm:$0xf]
  %v15 = vld [vmem:[%s0 + $0xc] sm:$0xf]
  %v16 = vld [vmem:[%s0 + $0x10] sm:$0xf]
  %v17 = vld [vmem:[%s0 + $0x14] sm:$0xf]
  %v18 = vld [vmem:[%s0 + $0x18] sm:$0xf]
  %v19 = vld [vmem:[%s0 + $0x1c] sm:$0xf]
  %v20 = vld [vmem:[%s0 + $0x20] sm:$0xf]
  %v21 = vld [vmem:[%s0 + $0x24] sm:$0xf]
  %v22 = vld [vmem:[%s0 + $0x28] sm:$0xf]
  %v23 = vld [vmem:[%s0 + $0x2c] sm:$0xf]
  %v24 = vld [vmem:[%s0 + $0x30] sm:$0xf]
  %v25 = vld [vmem:[%s0 + $0x34] sm:$0xf]
  %v26 = vld [vmem:[%s0 + $0x38] sm:$0xf]
  %v27 = vld [vmem:[%s0 + $0x3c] sm:$0xf]
  %v28 = vld [vmem:[%s1] sm:$0x3]
  %v45 = vunpack.c.l.b16 %v12
  %v46 = vunpack.c.l.b16 %v13
  %v47 = vunpack.c.l.b16 %v14
  %v48 = vunpack.c.l.b16 %v15
  %v49 = vunpack.c.l.b16 %v16
  %v50 = vunpack.c.l.b16 %v17
  %v51 = vunpack.c.l.b16 %v18
  %v52 = vunpack.c.l.b16 %v19
  %v53 = vunpack.c.l.b16 %v20
  %v54 = vunpack.c.l.b16 %v21
  %v55 = vunpack.c.l.b16 %v22
  %v56 = vunpack.c.l.b16 %v23
  %v57 = vunpack.c.l.b16 %v24
  %v58 = vunpack.c.l.b16 %v25
  %v59 = vunpack.c.l.b16 %v26
  %v60 = vunpack.c.l.b16 %v27
  %v61 = vpack.c.b16 %v46, %v45
  %v62 = vpack.c.b16 %v48, %v47
  %v63 = vpack.c.b16 %v50, %v49
  %v64 = vpack.c.b16 %v52, %v51
  %v65 = vpack.c.b16 %v54, %v53
  %v66 = vpack.c.b16 %v56, %v55
  %v67 = vpack.c.b16 %v58, %v57
  %v68 = vpack.c.b16 %v60, %v59
  %vm69 = vcmask 31744
  %v71 = vsel %vm69, %v61, 0
  %v74 = vsel %vm69, %v62, 0
  %v77 = vsel %vm69, %v63, 0
  %v80 = vsel %vm69, %v64, 0
  %v83 = vsel %vm69, %v65, 0
  %v86 = vsel %vm69, %v66, 0
  %v89 = vsel %vm69, %v67, 0
  %v92 = vsel %vm69, %v68, 0
  %vm94 = vcmask 1041408
  %v96 = vsel %vm94, %v28, 0
  %98 = vmatprep.subr.bf16.mxu0 0
  %99 = vmatpush1.bf16.msra.mxu0 %v96
  %100 = vmatprep.subr.bf16.mxu0 0
  %101 = vmatpush1.bf16.msra.mxu0 0
  %102 = vmatprep.subr.bf16.mxu0 0
  %103 = vmatpush1.bf16.msra.mxu0 0
  %104 = vmatprep.subr.bf16.mxu0 0
  %105 = vmatpush1.bf16.msra.mxu0 0
  %106 = vmatprep.subr.bf16.mxu0 0
  %107 = vmatpush1.bf16.msra.mxu0 0
  %108 = vmatprep.subr.bf16.mxu0 0
  %109 = vmatpush1.bf16.msra.mxu0 0
  %110 = vmatprep.subr.bf16.mxu0 0
  %111 = vmatpush1.bf16.msra.mxu0 0
  %112 = vmatprep.subr.bf16.mxu0 0
  %113 = vmatpush1.bf16.msra.mxu0 0
  %114 = vmatprep.subr.bf16.mxu0 0
  %115 = vmatpush1.bf16.msra.mxu0 0
  %116 = vmatprep.subr.bf16.mxu0 0
  %117 = vmatpush1.bf16.msra.mxu0 0
  %118 = vmatprep.subr.bf16.mxu0 0
  %119 = vmatpush1.bf16.msra.mxu0 0
  %120 = vmatprep.subr.bf16.mxu0 0
  %121 = vmatpush1.bf16.msra.mxu0 0
  %122 = vmatprep.subr.bf16.mxu0 0
  %123 = vmatpush1.bf16.msra.mxu0 0
  %124 = vmatprep.subr.bf16.mxu0 0
  %125 = vmatpush1.bf16.msra.mxu0 0
  %126 = vmatprep.subr.bf16.mxu0 0
  %127 = vmatpush1.bf16.msra.mxu0 0
  %128 = vmatprep.subr.bf16.mxu0 0
  %129 = vmatpush1.bf16.msra.mxu0 0
  %130 = vmatprep.mubr.bf16.mxu0 0
  %131 = vmatmul.mubr.bf16.gmra.mrb[0].mxu0 %v71
  %v132 = vpop.f32.mrb[0].mxu0
  %v133 = vadd.f32 0.0, %v132
  %v134 = vpop.f32.mrb[0].mxu0
  %v135 = vpop.f32.mrb[0].mxu0
  %v136 = vadd.f32 0.0, %v135
  %v137 = vpop.f32.mrb[0].mxu0
  %138 = vmatprep.mubr.bf16.mxu0 0
  %139 = vmatmul.mubr.bf16.gmra.mrb[0].mxu0 %v74
  %v140 = vpop.f32.mrb[0].mxu0
  %v141 = vadd.f32 0.0, %v140
  %v142 = vpop.f32.mrb[0].mxu0
  %v143 = vpop.f32.mrb[0].mxu0
  %v144 = vadd.f32 0.0, %v143
  %v145 = vpop.f32.mrb[0].mxu0
  %146 = vmatprep.mubr.bf16.mxu0 0
  %147 = vmatmul.mubr.bf16.gmra.mrb[0].mxu0 %v77
  %v148 = vpop.f32.mrb[0].mxu0
  %v149 = vadd.f32 0.0, %v148
  %v150 = vpop.f32.mrb[0].mxu0
  %v151 = vpop.f32.mrb[0].mxu0
  %v152 = vadd.f32 0.0, %v151
  %v153 = vpop.f32.mrb[0].mxu0
  %154 = vmatprep.mubr.bf16.mxu0 0
  %155 = vmatmul.mubr.bf16.gmra.mrb[0].mxu0 %v80
  %v156 = vpop.f32.mrb[0].mxu0
  %v157 = vadd.f32 0.0, %v156
  %v158 = vpop.f32.mrb[0].mxu0
  %v159 = vpop.f32.mrb[0].mxu0
  %v160 = vadd.f32 0.0, %v159
  %v161 = vpop.f32.mrb[0].mxu0
  %162 = vmatprep.mubr.bf16.mxu0 0
  %163 = vmatmul.mubr.bf16.gmra.mrb[0].mxu0 %v83
  %v164 = vpop.f32.mrb[0].mxu0
  %v165 = vadd.f32 0.0, %v164
  %v166 = vpop.f32.mrb[0].mxu0
  %v167 = vpop.f32.mrb[0].mxu0
  %v168 = vadd.f32 0.0, %v167
  %v169 = vpop.f32.mrb[0].mxu0
  %170 = vmatprep.mubr.bf16.mxu0 0
  %171 = vmatmul.mubr.bf16.gmra.mrb[0].mxu0 %v86
  %v172 = vpop.f32.mrb[0].mxu0
  %v173 = vadd.f32 0.0, %v172
  %v174 = vpop.f32.mrb[0].mxu0
  %v175 = vpop.f32.mrb[0].mxu0
  %v176 = vadd.f32 0.0, %v175
  %v177 = vpop.f32.mrb[0].mxu0
  %178 = vmatprep.mubr.bf16.mxu0 0
  %179 = vmatmul.mubr.bf16.gmra.mrb[0].mxu0 %v89
  %v180 = vpop.f32.mrb[0].mxu0
  %v181 = vadd.f32 0.0, %v180
  %v182 = vpop.f32.mrb[0].mxu0
  %v183 = vpop.f32.mrb[0].mxu0
  %v184 = vadd.f32 0.0, %v183
  %v185 = vpop.f32.mrb[0].mxu0
  %186 = vmatprep.mubr.bf16.mxu0 0
  %187 = vmatmul.mubr.bf16.gmra.mrb[0].mxu0 %v92
  %v188 = vpop.f32.mrb[0].mxu0
  %v189 = vadd.f32 0.0, %v188
  %v190 = vpop.f32.mrb[0].mxu0
  %v191 = vpop.f32.mrb[0].mxu0
  %v192 = vadd.f32 0.0, %v191
  %v193 = vpop.f32.mrb[0].mxu0
  %194 = vdwg.mxu0
  %vm195 = vcmask 64512
  %196 = vst.msk [vmem:[%s2] sm:$0xff] %vm195, %v133
  %197 = vst.msk [vmem:[%s2 + $0x8] sm:$0xff] %vm195, %v136
  %198 = vst.msk [vmem:[%s2 + $0x10] sm:$0xff] %vm195, %v141
  %199 = vst.msk [vmem:[%s2 + $0x18] sm:$0xff] %vm195, %v144
  %200 = vst.msk [vmem:[%s2 + $0x20] sm:$0xff] %vm195, %v149
  %201 = vst.msk [vmem:[%s2 + $0x28] sm:$0xff] %vm195, %v152
  %202 = vst.msk [vmem:[%s2 + $0x30] sm:$0xff] %vm195, %v157
  %203 = vst.msk [vmem:[%s2 + $0x38] sm:$0xff] %vm195, %v160
  %204 = vst.msk [vmem:[%s2 + $0x40] sm:$0xff] %vm195, %v165
  %205 = vst.msk [vmem:[%s2 + $0x48] sm:$0xff] %vm195, %v168
  %206 = vst.msk [vmem:[%s2 + $0x50] sm:$0xff] %vm195, %v173
  %207 = vst.msk [vmem:[%s2 + $0x58] sm:$0xff] %vm195, %v176
  %208 = vst.msk [vmem:[%s2 + $0x60] sm:$0xff] %vm195, %v181
  %209 = vst.msk [vmem:[%s2 + $0x68] sm:$0xff] %vm195, %v184
  %210 = vst.msk [vmem:[%s2 + $0x70] sm:$0xff] %vm195, %v189
  %211 = vst.msk [vmem:[%s2 + $0x78] sm:$0xff] %vm195, %v192
  // Predicated region
  $region10: #{network_block_nchw.18} parent=0 // pred_check
    _
  $region11: #{network_block_nchw.18} parent=0 // pred_check_branch
    %213 = sbr.rel (0) target = $region13
  $region12: #{network_block_nchw.18} parent=0 // pred_region
    _
  $region13: #{network_block_nchw.18} parent=0 // pred_fallthru
    _
  // Predicated region
  $region14: #{network_block_nchw.18} parent=0 // pred_check
    _
  $region15: #{network_block_nchw.18} parent=0 // pred_check_branch
    %215 = sbr.rel (0) target = $region17
  $region16: #{network_block_nchw.18} parent=0 // pred_region
    _
  $region17: #{network_block_nchw.18} parent=0 // pred_fallthru
    _

// kernel: network_block_nchw.15
$region0: #{network_block_nchw.15}
  #allocation0 [shape = 'u32[]', space=smem, size = 0x4, offset = 0x4, fixed_abs, tag = 'smem constant byte address 0x4 - core index']
  #allocation1 [shape = 'u32[144,128]{1,0:T(1,128)}', space=vmem, size = 0x12000, scoped, tag = 'internal scratch']
  %s0 = inlined_call_operand.vmem [shape: bf16[128,36], index: 0, kind: input, shape index: {}]
  %s1 = inlined_call_operand.vmem [shape: bf16[36,8], index: 1, kind: input, shape index: {}]
  %s2 = inlined_call_operand.vmem [shape: f32[128,8], index: 2, kind: output, shape index: {}]
  %s3 = sld [smem:[#allocation0]]
  $region18: #{network_block_nchw.15} parent=0
    _
  %s5 = ssub.s32 1, %s3
  %s6 = scalar_select 0, %s5, %s3
  // Predicated region
  $region2: #{network_block_nchw.15} parent=0 // pred_check
    _
  $region3: #{network_block_nchw.15} parent=0 // pred_check_branch
    %8 = sbr.rel (0) target = $region5
  $region4: #{network_block_nchw.15} parent=0 // pred_region
    _
  $region5: #{network_block_nchw.15} parent=0 // pred_fallthru
    _
  // Predicated region
  $region6: #{network_block_nchw.15} parent=0 // pred_check
    _
  $region7: #{network_block_nchw.15} parent=0 // pred_check_branch
    %10 = sbr.rel (0) target = $region9
  $region8: #{network_block_nchw.15} parent=0 // pred_region
    _
  $region9: #{network_block_nchw.15} parent=0 // pred_fallthru
    _
  %v12 = vld [vmem:[%s0] sm:$0xf]
  %v13 = vld [vmem:[%s0 + $0x4] sm:$0xf]
  %v14 = vld [vmem:[%s0 + $0x8] sm:$0xf]
  %v15 = vld [vmem:[%s0 + $0xc] sm:$0xf]
  %v16 = vld [vmem:[%s0 + $0x10] sm:$0xf]
  %v17 = vld [vmem:[%s0 + $0x14] sm:$0xf]
  %v18 = vld [vmem:[%s0 + $0x18] sm:$0xf]
  %v19 = vld [vmem:[%s0 + $0x1c] sm:$0xf]
  %v20 = vld [vmem:[%s0 + $0x20] sm:$0xf]
  %v21 = vld [vmem:[%s0 + $0x24] sm:$0xf]
  %v22 = vld [vmem:[%s0 + $0x28] sm:$0xf]
  %v23 = vld [vmem:[%s0 + $0x2c] sm:$0xf]
  %v24 = vld [vmem:[%s0 + $0x30] sm:$0xf]
  %v25 = vld [vmem:[%s0 + $0x34] sm:$0xf]
  %v26 = vld [vmem:[%s0 + $0x38] sm:$0xf]
  %v27 = vld [vmem:[%s0 + $0x3c] sm:$0xf]
  %v28 = vld [vmem:[%s1] sm:$0xf]
  %v29 = vld [vmem:[%s1 + $0x4] sm:$0xf]
  %v30 = vld [vmem:[%s1 + $0x8] sm:$0xf]
  %v31 = vld [vmem:[%s1 + $0xc] sm:$0xf]
  %v32 = vld [vmem:[%s1 + $0x10] sm:$0x3]
  %v49 = vunpack.c.l.b16 %v12
  %v50 = vunpack.c.l.b16 %v13
  %v51 = vunpack.c.l.b16 %v14
  %v52 = vunpack.c.l.b16 %v15
  %v53 = vunpack.c.l.b16 %v16
  %v54 = vunpack.c.l.b16 %v17
  %v55 = vunpack.c.l.b16 %v18
  %v56 = vunpack.c.l.b16 %v19
  %v57 = vunpack.c.l.b16 %v20
  %v58 = vunpack.c.l.b16 %v21
  %v59 = vunpack.c.l.b16 %v22
  %v60 = vunpack.c.l.b16 %v23
  %v61 = vunpack.c.l.b16 %v24
  %v62 = vunpack.c.l.b16 %v25
  %v63 = vunpack.c.l.b16 %v26
  %v64 = vunpack.c.l.b16 %v27
  %v65 = vpack.c.b16 %v50, %v49
  %v66 = vpack.c.b16 %v52, %v51
  %v67 = vpack.c.b16 %v54, %v53
  %v68 = vpack.c.b16 %v56, %v55
  %v69 = vpack.c.b16 %v58, %v57
  %v70 = vpack.c.b16 %v60, %v59
  %v71 = vpack.c.b16 %v62, %v61
  %v72 = vpack.c.b16 %v64, %v63
  %v78 = vunpack.c.l.b16 %v28
  %v79 = vunpack.c.l.b16 %v29
  %v80 = vunpack.c.l.b16 %v30
  %v81 = vunpack.c.l.b16 %v31
  %v82 = vunpack.c.l.b16 %v32
  %v83 = vpack.c.b16 %v79, %v78
  %v84 = vpack.c.b16 %v81, %v80
  %v85 = vpack.c.b16 %v82, %v82
  %vm88 = vcmask 293888
  %v90 = vsel %vm88, %v65, 0
  %v93 = vsel %vm88, %v66, 0
  %v96 = vsel %vm88, %v67, 0
  %v99 = vsel %vm88, %v68, 0
  %v102 = vsel %vm88, %v69, 0
  %v105 = vsel %vm88, %v70, 0
  %v108 = vsel %vm88, %v71, 0
  %v111 = vsel %vm88, %v72, 0
  %vm113 = vcmask 1041408
  %v115 = vsel %vm113, %v85, 0
  %117 = vmatprep.subr.bf16.mxu0 0
  %118 = vmatpush1.bf16.msra.mxu0 %v83
  %119 = vmatprep.subr.bf16.mxu0 0
  %120 = vmatpush1.bf16.msra.mxu0 %v84
  %121 = vmatprep.subr.bf16.mxu0 0
  %122 = vmatpush1.bf16.msra.mxu0 %v115
  %123 = vmatprep.subr.bf16.mxu0 0
  %124 = vmatpush1.bf16.msra.mxu0 0
  %125 = vmatprep.subr.bf16.mxu0 0
  %126 = vmatpush1.bf16.msra.mxu0 0
  %127 = vmatprep.subr.bf16.mxu0 0
  %128 = vmatpush1.bf16.msra.mxu0 0
  %129 = vmatprep.subr.bf16.mxu0 0
  %130 = vmatpush1.bf16.msra.mxu0 0
  %131 = vmatprep.subr.bf16.mxu0 0
  %132 = vmatpush1.bf16.msra.mxu0 0
  %133 = vmatprep.subr.bf16.mxu0 0
  %134 = vmatpush1.bf16.msra.mxu0 0
  %135 = vmatprep.subr.bf16.mxu0 0
  %136 = vmatpush1.bf16.msra.mxu0 0
  %137 = vmatprep.subr.bf16.mxu0 0
  %138 = vmatpush1.bf16.msra.mxu0 0
  %139 = vmatprep.subr.bf16.mxu0 0
  %140 = vmatpush1.bf16.msra.mxu0 0
  %141 = vmatprep.subr.bf16.mxu0 0
  %142 = vmatpush1.bf16.msra.mxu0 0
  %143 = vmatprep.subr.bf16.mxu0 0
  %144 = vmatpush1.bf16.msra.mxu0 0
  %145 = vmatprep.subr.bf16.mxu0 0
  %146 = vmatpush1.bf16.msra.mxu0 0
  %147 = vmatprep.subr.bf16.mxu0 0
  %148 = vmatpush1.bf16.msra.mxu0 0
  %149 = vmatprep.mubr.bf16.mxu0 0
  %150 = vmatmul.mubr.bf16.gmra.mrb[0].mxu0 %v90
  %v151 = vpop.f32.mrb[0].mxu0
  %v152 = vadd.f32 0.0, %v151
  %v153 = vpop.f32.mrb[0].mxu0
  %v154 = vpop.f32.mrb[0].mxu0
  %v155 = vadd.f32 0.0, %v154
  %v156 = vpop.f32.mrb[0].mxu0
  %157 = vmatprep.mubr.bf16.mxu0 0
  %158 = vmatmul.mubr.bf16.gmra.mrb[0].mxu0 %v93
  %v159 = vpop.f32.mrb[0].mxu0
  %v160 = vadd.f32 0.0, %v159
  %v161 = vpop.f32.mrb[0].mxu0
  %v162 = vpop.f32.mrb[0].mxu0
  %v163 = vadd.f32 0.0, %v162
  %v164 = vpop.f32.mrb[0].mxu0
  %165 = vmatprep.mubr.bf16.mxu0 0
  %166 = vmatmul.mubr.bf16.gmra.mrb[0].mxu0 %v96
  %v167 = vpop.f32.mrb[0].mxu0
  %v168 = vadd.f32 0.0, %v167
  %v169 = vpop.f32.mrb[0].mxu0
  %v170 = vpop.f32.mrb[0].mxu0
  %v171 = vadd.f32 0.0, %v170
  %v172 = vpop.f32.mrb[0].mxu0
  %173 = vmatprep.mubr.bf16.mxu0 0
  %174 = vmatmul.mubr.bf16.gmra.mrb[0].mxu0 %v99
  %v175 = vpop.f32.mrb[0].mxu0
  %v176 = vadd.f32 0.0, %v175
  %v177 = vpop.f32.mrb[0].mxu0
  %v178 = vpop.f32.mrb[0].mxu0
  %v179 = vadd.f32 0.0, %v178
  %v180 = vpop.f32.mrb[0].mxu0
  %181 = vmatprep.mubr.bf16.mxu0 0
  %182 = vmatmul.mubr.bf16.gmra.mrb[0].mxu0 %v102
  %v183 = vpop.f32.mrb[0].mxu0
  %v184 = vadd.f32 0.0, %v183
  %v185 = vpop.f32.mrb[0].mxu0
  %v186 = vpop.f32.mrb[0].mxu0
  %v187 = vadd.f32 0.0, %v186
  %v188 = vpop.f32.mrb[0].mxu0
  %189 = vmatprep.mubr.bf16.mxu0 0
  %190 = vmatmul.mubr.bf16.gmra.mrb[0].mxu0 %v105
  %v191 = vpop.f32.mrb[0].mxu0
  %v192 = vadd.f32 0.0, %v191
  %v193 = vpop.f32.mrb[0].mxu0
  %v194 = vpop.f32.mrb[0].mxu0
  %v195 = vadd.f32 0.0, %v194
  %v196 = vpop.f32.mrb[0].mxu0
  %197 = vmatprep.mubr.bf16.mxu0 0
  %198 = vmatmul.mubr.bf16.gmra.mrb[0].mxu0 %v108
  %v199 = vpop.f32.mrb[0].mxu0
  %v200 = vadd.f32 0.0, %v199
  %v201 = vpop.f32.mrb[0].mxu0
  %v202 = vpop.f32.mrb[0].mxu0
  %v203 = vadd.f32 0.0, %v202
  %v204 = vpop.f32.mrb[0].mxu0
  %205 = vmatprep.mubr.bf16.mxu0 0
  %206 = vmatmul.mubr.bf16.gmra.mrb[0].mxu0 %v111
  %v207 = vpop.f32.mrb[0].mxu0
  %v208 = vadd.f32 0.0, %v207
  %v209 = vpop.f32.mrb[0].mxu0
  %v210 = vpop.f32.mrb[0].mxu0
  %v211 = vadd.f32 0.0, %v210
  %v212 = vpop.f32.mrb[0].mxu0
  %213 = vdwg.mxu0
  %vm214 = vcmask 64512
  %215 = vst.msk [vmem:[%s2] sm:$0xff] %vm214, %v152
  %216 = vst.msk [vmem:[%s2 + $0x8] sm:$0xff] %vm214, %v155
  %217 = vst.msk [vmem:[%s2 + $0x10] sm:$0xff] %vm214, %v160
  %218 = vst.msk [vmem:[%s2 + $0x18] sm:$0xff] %vm214, %v163
  %219 = vst.msk [vmem:[%s2 + $0x20] sm:$0xff] %vm214, %v168
  %220 = vst.msk [vmem:[%s2 + $0x28] sm:$0xff] %vm214, %v171
  %221 = vst.msk [vmem:[%s2 + $0x30] sm:$0xff] %vm214, %v176
  %222 = vst.msk [vmem:[%s2 + $0x38] sm:$0xff] %vm214, %v179
  %223 = vst.msk [vmem:[%s2 + $0x40] sm:$0xff] %vm214, %v184
  %224 = vst.msk [vmem:[%s2 + $0x48] sm:$0xff] %vm214, %v187
  %225 = vst.msk [vmem:[%s2 + $0x50] sm:$0xff] %vm214, %v192
  %226 = vst.msk [vmem:[%s2 + $0x58] sm:$0xff] %vm214, %v195
  %227 = vst.msk [vmem:[%s2 + $0x60] sm:$0xff] %vm214, %v200
  %228 = vst.msk [vmem:[%s2 + $0x68] sm:$0xff] %vm214, %v203
  %229 = vst.msk [vmem:[%s2 + $0x70] sm:$0xff] %vm214, %v208
  %230 = vst.msk [vmem:[%s2 + $0x78] sm:$0xff] %vm214, %v211
  // Predicated region
  $region10: #{network_block_nchw.15} parent=0 // pred_check
    _
  $region11: #{network_block_nchw.15} parent=0 // pred_check_branch
    %232 = sbr.rel (0) target = $region13
  $region12: #{network_block_nchw.15} parent=0 // pred_region
    _
  $region13: #{network_block_nchw.15} parent=0 // pred_fallthru
    _
  // Predicated region
  $region14: #{network_block_nchw.15} parent=0 // pred_check
    _
  $region15: #{network_block_nchw.15} parent=0 // pred_check_branch
    %234 = sbr.rel (0) target = $region17
  $region16: #{network_block_nchw.15} parent=0 // pred_region
    _
  $region17: #{network_block_nchw.15} parent=0 // pred_fallthru
    _

// kernel: network_block_nchw.17
$region0: #{network_block_nchw.17}
  #allocation0 [shape = 'u32[]', space=smem, size = 0x4, offset = 0x4, fixed_abs, tag = 'smem constant byte address 0x4 - core index']
  #allocation1 [shape = 'u32[144,128]{1,0:T(1,128)}', space=vmem, size = 0x12000, scoped, tag = 'internal scratch']
  %s0 = inlined_call_operand.vmem [shape: f32[128,8], index: 0, kind: input, shape index: {}]
  %s1 = inlined_call_operand.vmem [shape: f32[1,8], index: 1, kind: input, shape index: {}]
  %s2 = inlined_call_operand.vmem [shape: f32[1,8], index: 2, kind: input, shape index: {}]
  %s3 = inlined_call_operand.vmem [shape: bf16[128,8], index: 3, kind: output, shape index: {}]
  %s4 = sld [smem:[#allocation0]]
  $region22: #{network_block_nchw.17} parent=0
    _
  %s6 = ssub.s32 1, %s4
  %s7 = scalar_select 0, %s6, %s4
  // Predicated region
  $region2: #{network_block_nchw.17} parent=0 // pred_check
    _
  $region3: #{network_block_nchw.17} parent=0 // pred_check_branch
    %9 = sbr.rel (0) target = $region5
  $region4: #{network_block_nchw.17} parent=0 // pred_region
    _
  $region5: #{network_block_nchw.17} parent=0 // pred_fallthru
    _
  // Predicated region
  $region6: #{network_block_nchw.17} parent=0 // pred_check
    _
  $region7: #{network_block_nchw.17} parent=0 // pred_check_branch
    %11 = sbr.rel (0) target = $region9
  $region8: #{network_block_nchw.17} parent=0 // pred_region
    _
  $region9: #{network_block_nchw.17} parent=0 // pred_fallthru
    _
  // Predicated region
  $region10: #{network_block_nchw.17} parent=0 // pred_check
    _
  $region11: #{network_block_nchw.17} parent=0 // pred_check_branch
    %13 = sbr.rel (0) target = $region13
  $region12: #{network_block_nchw.17} parent=0 // pred_region
    _
  $region13: #{network_block_nchw.17} parent=0 // pred_fallthru
    _
  %v14 = vld [vmem:[%s0] sm:$0xff]
  %v15 = vld [vmem:[%s0 + $0x8] sm:$0xff]
  %v16 = vld [vmem:[%s0 + $0x10] sm:$0xff]
  %v17 = vld [vmem:[%s0 + $0x18] sm:$0xff]
  %v18 = vld [vmem:[%s0 + $0x20] sm:$0xff]
  %v19 = vld [vmem:[%s0 + $0x28] sm:$0xff]
  %v20 = vld [vmem:[%s0 + $0x30] sm:$0xff]
  %v21 = vld [vmem:[%s0 + $0x38] sm:$0xff]
  %v22 = vld [vmem:[%s0 + $0x40] sm:$0xff]
  %v23 = vld [vmem:[%s0 + $0x48] sm:$0xff]
  %v24 = vld [vmem:[%s0 + $0x50] sm:$0xff]
  %v25 = vld [vmem:[%s0 + $0x58] sm:$0xff]
  %v26 = vld [vmem:[%s0 + $0x60] sm:$0xff]
  %v27 = vld [vmem:[%s0 + $0x68] sm:$0xff]
  %v28 = vld [vmem:[%s0 + $0x70] sm:$0xff]
  %v29 = vld [vmem:[%s0 + $0x78] sm:$0xff]
  %v30 = vld [vmem:[%s1] sm:$0x1]
  %v32 = vlaneseq
  %v33 = vshrl.u32 %v32, 7
  %v34 = vsub.s32 0, %v33
  %v35 = vrot.slane %v30, %v34
  %v37 = vmul.f32 %v14, %v35
  %v38 = vmul.f32 %v15, %v35
  %v39 = vmul.f32 %v16, %v35
  %v40 = vmul.f32 %v17, %v35
  %v41 = vmul.f32 %v18, %v35
  %v42 = vmul.f32 %v19, %v35
  %v43 = vmul.f32 %v20, %v35
  %v44 = vmul.f32 %v21, %v35
  %v45 = vmul.f32 %v22, %v35
  %v46 = vmul.f32 %v23, %v35
  %v47 = vmul.f32 %v24, %v35
  %v48 = vmul.f32 %v25, %v35
  %v49 = vmul.f32 %v26, %v35
  %v50 = vmul.f32 %v27, %v35
  %v51 = vmul.f32 %v28, %v35
  %v52 = vmul.f32 %v29, %v35
  %v53 = vld [vmem:[%s2] sm:$0x1]
  %v55 = vlaneseq
  %v56 = vshrl.u32 %v55, 7
  %v57 = vsub.s32 0, %v56
  %v58 = vrot.slane %v53, %v57
  %v60 = vadd.f32 %v37, %v58
  %v61 = vadd.f32 %v38, %v58
  %v62 = vadd.f32 %v39, %v58
  %v63 = vadd.f32 %v40, %v58
  %v64 = vadd.f32 %v41, %v58
  %v65 = vadd.f32 %v42, %v58
  %v66 = vadd.f32 %v43, %v58
  %v67 = vadd.f32 %v44, %v58
  %v68 = vadd.f32 %v45, %v58
  %v69 = vadd.f32 %v46, %v58
  %v70 = vadd.f32 %v47, %v58
  %v71 = vadd.f32 %v48, %v58
  %v72 = vadd.f32 %v49, %v58
  %v73 = vadd.f32 %v50, %v58
  %v74 = vadd.f32 %v51, %v58
  %v75 = vadd.f32 %v52, %v58
  %v76 = vmax.f32 %v60, 0.0
  %v77 = vmax.f32 %v61, 0.0
  %v78 = vmax.f32 %v62, 0.0
  %v79 = vmax.f32 %v63, 0.0
  %v80 = vmax.f32 %v64, 0.0
  %v81 = vmax.f32 %v65, 0.0
  %v82 = vmax.f32 %v66, 0.0
  %v83 = vmax.f32 %v67, 0.0
  %v84 = vmax.f32 %v68, 0.0
  %v85 = vmax.f32 %v69, 0.0
  %v86 = vmax.f32 %v70, 0.0
  %v87 = vmax.f32 %v71, 0.0
  %v88 = vmax.f32 %v72, 0.0
  %v89 = vmax.f32 %v73, 0.0
  %v90 = vmax.f32 %v74, 0.0
  %v91 = vmax.f32 %v75, 0.0
  %v92 = vpack.c.bf16 %v77, %v76
  %v93 = vpack.c.bf16 %v79, %v78
  %v94 = vpack.c.bf16 %v81, %v80
  %v95 = vpack.c.bf16 %v83, %v82
  %v96 = vpack.c.bf16 %v85, %v84
  %v97 = vpack.c.bf16 %v87, %v86
  %v98 = vpack.c.bf16 %v89, %v88
  %v99 = vpack.c.bf16 %v91, %v90
  %v108 = vunpack.c.l.b16 %v92
  %v109 = vunpack.c.h.b16 %v92
  %v110 = vunpack.c.l.b16 %v93
  %v111 = vunpack.c.h.b16 %v93
  %v112 = vunpack.c.l.b16 %v94
  %v113 = vunpack.c.h.b16 %v94
  %v114 = vunpack.c.l.b16 %v95
  %v115 = vunpack.c.h.b16 %v95
  %v116 = vunpack.c.l.b16 %v96
  %v117 = vunpack.c.h.b16 %v96
  %v118 = vunpack.c.l.b16 %v97
  %v119 = vunpack.c.h.b16 %v97
  %v120 = vunpack.c.l.b16 %v98
  %v121 = vunpack.c.h.b16 %v98
  %v122 = vunpack.c.l.b16 %v99
  %v123 = vunpack.c.h.b16 %v99
  %v124 = vpack.c.b16 %v108, %v108
  %v125 = vpack.c.b16 %v109, %v109
  %v126 = vpack.c.b16 %v110, %v110
  %v127 = vpack.c.b16 %v111, %v111
  %v128 = vpack.c.b16 %v112, %v112
  %v129 = vpack.c.b16 %v113, %v113
  %v130 = vpack.c.b16 %v114, %v114
  %v131 = vpack.c.b16 %v115, %v115
  %v132 = vpack.c.b16 %v116, %v116
  %v133 = vpack.c.b16 %v117, %v117
  %v134 = vpack.c.b16 %v118, %v118
  %v135 = vpack.c.b16 %v119, %v119
  %v136 = vpack.c.b16 %v120, %v120
  %v137 = vpack.c.b16 %v121, %v121
  %v138 = vpack.c.b16 %v122, %v122
  %v139 = vpack.c.b16 %v123, %v123
  %vm156 = vcmask 60416
  %157 = vst.msk [vmem:[%s3] sm:$0xf] %vm156, %v124
  %158 = vst.msk [vmem:[%s3 + $0x4] sm:$0xf] %vm156, %v125
  %159 = vst.msk [vmem:[%s3 + $0x8] sm:$0xf] %vm156, %v126
  %160 = vst.msk [vmem:[%s3 + $0xc] sm:$0xf] %vm156, %v127
  %161 = vst.msk [vmem:[%s3 + $0x10] sm:$0xf] %vm156, %v128
  %162 = vst.msk [vmem:[%s3 + $0x14] sm:$0xf] %vm156, %v129
  %163 = vst.msk [vmem:[%s3 + $0x18] sm:$0xf] %vm156, %v130
  %164 = vst.msk [vmem:[%s3 + $0x1c] sm:$0xf] %vm156, %v131
  %165 = vst.msk [vmem:[%s3 + $0x20] sm:$0xf] %vm156, %v132
  %166 = vst.msk [vmem:[%s3 + $0x24] sm:$0xf] %vm156, %v133
  %167 = vst.msk [vmem:[%s3 + $0x28] sm:$0xf] %vm156, %v134
  %168 = vst.msk [vmem:[%s3 + $0x2c] sm:$0xf] %vm156, %v135
  %169 = vst.msk [vmem:[%s3 + $0x30] sm:$0xf] %vm156, %v136
  %170 = vst.msk [vmem:[%s3 + $0x34] sm:$0xf] %vm156, %v137
  %171 = vst.msk [vmem:[%s3 + $0x38] sm:$0xf] %vm156, %v138
  %172 = vst.msk [vmem:[%s3 + $0x3c] sm:$0xf] %vm156, %v139
  // Predicated region
  $region14: #{network_block_nchw.17} parent=0 // pred_check
    _
  $region15: #{network_block_nchw.17} parent=0 // pred_check_branch
    %174 = sbr.rel (0) target = $region17
  $region16: #{network_block_nchw.17} parent=0 // pred_region
    _
  $region17: #{network_block_nchw.17} parent=0 // pred_fallthru
    _
  // Predicated region
  $region18: #{network_block_nchw.17} parent=0 // pred_check
    _
  $region19: #{network_block_nchw.17} parent=0 // pred_check_branch
    %176 = sbr.rel (0) target = $region21
  $region20: #{network_block_nchw.17} parent=0 // pred_region
    _
  $region21: #{network_block_nchw.17} parent=0 // pred_fallthru
    _

// kernel: network_block_nchw.19
$region0: #{network_block_nchw.19}
  #allocation0 [shape = 'u32[]', space=smem, size = 0x4, offset = 0x4, fixed_abs, tag = 'smem constant byte address 0x4 - core index']
  #allocation1 [shape = 'u32[144,128]{1,0:T(1,128)}', space=vmem, size = 0x12000, scoped, tag = 'internal scratch']
  %s0 = inlined_call_operand.vmem [shape: bf16[128,72], index: 0, kind: input, shape index: {}]
  %s1 = inlined_call_operand.vmem [shape: bf16[72,8], index: 1, kind: input, shape index: {}]
  %s2 = inlined_call_operand.vmem [shape: f32[128,8], index: 2, kind: input, shape index: {}]
  %s3 = inlined_call_operand.vmem [shape: f32[128,8], index: 3, kind: output, shape index: {}]
  %s4 = sld [smem:[#allocation0]]
  $region22: #{network_block_nchw.19} parent=0
    _
  %s6 = ssub.s32 1, %s4
  %s7 = scalar_select 0, %s6, %s4
  // Predicated region
  $region2: #{network_block_nchw.19} parent=0 // pred_check
    _
  $region3: #{network_block_nchw.19} parent=0 // pred_check_branch
    %9 = sbr.rel (0) target = $region5
  $region4: #{network_block_nchw.19} parent=0 // pred_region
    _
  $region5: #{network_block_nchw.19} parent=0 // pred_fallthru
    _
  // Predicated region
  $region6: #{network_block_nchw.19} parent=0 // pred_check
    _
  $region7: #{network_block_nchw.19} parent=0 // pred_check_branch
    %11 = sbr.rel (0) target = $region9
  $region8: #{network_block_nchw.19} parent=0 // pred_region
    _
  $region9: #{network_block_nchw.19} parent=0 // pred_fallthru
    _
  // Predicated region
  $region10: #{network_block_nchw.19} parent=0 // pred_check
    _
  $region11: #{network_block_nchw.19} parent=0 // pred_check_branch
    %13 = sbr.rel (0) target = $region13
  $region12: #{network_block_nchw.19} parent=0 // pred_region
    _
  $region13: #{network_block_nchw.19} parent=0 // pred_fallthru
    _
  %v15 = vld [vmem:[%s0] sm:$0xf]
  %v16 = vld [vmem:[%s0 + $0x4] sm:$0xf]
  %v17 = vld [vmem:[%s0 + $0x8] sm:$0xf]
  %v18 = vld [vmem:[%s0 + $0xc] sm:$0xf]
  %v19 = vld [vmem:[%s0 + $0x10] sm:$0xf]
  %v20 = vld [vmem:[%s0 + $0x14] sm:$0xf]
  %v21 = vld [vmem:[%s0 + $0x18] sm:$0xf]
  %v22 = vld [vmem:[%s0 + $0x1c] sm:$0xf]
  %v23 = vld [vmem:[%s0 + $0x20] sm:$0xf]
  %v24 = vld [vmem:[%s0 + $0x24] sm:$0xf]
  %v25 = vld [vmem:[%s0 + $0x28] sm:$0xf]
  %v26 = vld [vmem:[%s0 + $0x2c] sm:$0xf]
  %v27 = vld [vmem:[%s0 + $0x30] sm:$0xf]
  %v28 = vld [vmem:[%s0 + $0x34] sm:$0xf]
  %v29 = vld [vmem:[%s0 + $0x38] sm:$0xf]
  %v30 = vld [vmem:[%s0 + $0x3c] sm:$0xf]
  %v31 = vld [vmem:[%s1] sm:$0xf]
  %v32 = vld [vmem:[%s1 + $0x4] sm:$0xf]
  %v33 = vld [vmem:[%s1 + $0x8] sm:$0xf]
  %v34 = vld [vmem:[%s1 + $0xc] sm:$0xf]
  %v35 = vld [vmem:[%s1 + $0x10] sm:$0xf]
  %v36 = vld [vmem:[%s1 + $0x14] sm:$0xf]
  %v37 = vld [vmem:[%s1 + $0x18] sm:$0xf]
  %v38 = vld [vmem:[%s1 + $0x1c] sm:$0xf]
  %v39 = vld [vmem:[%s1 + $0x20] sm:$0xf]
  %v40 = vld [vmem:[%s2] sm:$0xff]
  %v41 = vld [vmem:[%s2 + $0x8] sm:$0xff]
  %v42 = vld [vmem:[%s2 + $0x10] sm:$0xff]
  %v43 = vld [vmem:[%s2 + $0x18] sm:$0xff]
  %v44 = vld [vmem:[%s2 + $0x20] sm:$0xff]
  %v45 = vld [vmem:[%s2 + $0x28] sm:$0xff]
  %v46 = vld [vmem:[%s2 + $0x30] sm:$0xff]
  %v47 = vld [vmem:[%s2 + $0x38] sm:$0xff]
  %v48 = vld [vmem:[%s2 + $0x40] sm:$0xff]
  %v49 = vld [vmem:[%s2 + $0x48] sm:$0xff]
  %v50 = vld [vmem:[%s2 + $0x50] sm:$0xff]
  %v51 = vld [vmem:[%s2 + $0x58] sm:$0xff]
  %v52 = vld [vmem:[%s2 + $0x60] sm:$0xff]
  %v53 = vld [vmem:[%s2 + $0x68] sm:$0xff]
  %v54 = vld [vmem:[%s2 + $0x70] sm:$0xff]
  %v55 = vld [vmem:[%s2 + $0x78] sm:$0xff]
  %v72 = vunpack.c.l.b16 %v15
  %v73 = vunpack.c.l.b16 %v16
  %v74 = vunpack.c.l.b16 %v17
  %v75 = vunpack.c.l.b16 %v18
  %v76 = vunpack.c.l.b16 %v19
  %v77 = vunpack.c.l.b16 %v20
  %v78 = vunpack.c.l.b16 %v21
  %v79 = vunpack.c.l.b16 %v22
  %v80 = vunpack.c.l.b16 %v23
  %v81 = vunpack.c.l.b16 %v24
  %v82 = vunpack.c.l.b16 %v25
  %v83 = vunpack.c.l.b16 %v26
  %v84 = vunpack.c.l.b16 %v27
  %v85 = vunpack.c.l.b16 %v28
  %v86 = vunpack.c.l.b16 %v29
  %v87 = vunpack.c.l.b16 %v30
  %v88 = vpack.c.b16 %v73, %v72
  %v89 = vpack.c.b16 %v75, %v74
  %v90 = vpack.c.b16 %v77, %v76
  %v91 = vpack.c.b16 %v79, %v78
  %v92 = vpack.c.b16 %v81, %v80
  %v93 = vpack.c.b16 %v83, %v82
  %v94 = vpack.c.b16 %v85, %v84
  %v95 = vpack.c.b16 %v87, %v86
  %v105 = vunpack.c.l.b16 %v31
  %v106 = vunpack.c.l.b16 %v32
  %v107 = vunpack.c.l.b16 %v33
  %v108 = vunpack.c.l.b16 %v34
  %v109 = vunpack.c.l.b16 %v35
  %v110 = vunpack.c.l.b16 %v36
  %v111 = vunpack.c.l.b16 %v37
  %v112 = vunpack.c.l.b16 %v38
  %v113 = vunpack.c.l.b16 %v39
  %v114 = vpack.c.b16 %v106, %v105
  %v115 = vpack.c.b16 %v108, %v107
  %v116 = vpack.c.b16 %v110, %v109
  %v117 = vpack.c.b16 %v112, %v111
  %v118 = vpack.c.b16 %v113, %v113
  %vm123 = vcmask 588800
  %v125 = vsel %vm123, %v88, 0
  %v128 = vsel %vm123, %v89, 0
  %v131 = vsel %vm123, %v90, 0
  %v134 = vsel %vm123, %v91, 0
  %v137 = vsel %vm123, %v92, 0
  %v140 = vsel %vm123, %v93, 0
  %v143 = vsel %vm123, %v94, 0
  %v146 = vsel %vm123, %v95, 0
  %vm148 = vcmask 1043456
  %v150 = vsel %vm148, %v118, 0
  %152 = vmatprep.subr.bf16.mxu0 0
  %153 = vmatpush1.bf16.msra.mxu0 %v114
  %154 = vmatprep.subr.bf16.mxu0 0
  %155 = vmatpush1.bf16.msra.mxu0 %v115
  %156 = vmatprep.subr.bf16.mxu0 0
  %157 = vmatpush1.bf16.msra.mxu0 %v116
  %158 = vmatprep.subr.bf16.mxu0 0
  %159 = vmatpush1.bf16.msra.mxu0 %v117
  %160 = vmatprep.subr.bf16.mxu0 0
  %161 = vmatpush1.bf16.msra.mxu0 %v150
  %162 = vmatprep.subr.bf16.mxu0 0
  %163 = vmatpush1.bf16.msra.mxu0 0
  %164 = vmatprep.subr.bf16.mxu0 0
  %165 = vmatpush1.bf16.msra.mxu0 0
  %166 = vmatprep.subr.bf16.mxu0 0
  %167 = vmatpush1.bf16.msra.mxu0 0
  %168 = vmatprep.subr.bf16.mxu0 0
  %169 = vmatpush1.bf16.msra.mxu0 0
  %170 = vmatprep.subr.bf16.mxu0 0
  %171 = vmatpush1.bf16.msra.mxu0 0
  %172 = vmatprep.subr.bf16.mxu0 0
  %173 = vmatpush1.bf16.msra.mxu0 0
  %174 = vmatprep.subr.bf16.mxu0 0
  %175 = vmatpush1.bf16.msra.mxu0 0
  %176 = vmatprep.subr.bf16.mxu0 0
  %177 = vmatpush1.bf16.msra.mxu0 0
  %178 = vmatprep.subr.bf16.mxu0 0
  %179 = vmatpush1.bf16.msra.mxu0 0
  %180 = vmatprep.subr.bf16.mxu0 0
  %181 = vmatpush1.bf16.msra.mxu0 0
  %182 = vmatprep.subr.bf16.mxu0 0
  %183 = vmatpush1.bf16.msra.mxu0 0
  %184 = vmatprep.mubr.bf16.mxu0 0
  %185 = vmatmul.mubr.bf16.gmra.mrb[0].mxu0 %v125
  %v186 = vpop.f32.mrb[0].mxu0
  %v187 = vadd.f32 %v40, %v186
  %v188 = vpop.f32.mrb[0].mxu0
  %v189 = vpop.f32.mrb[0].mxu0
  %v190 = vadd.f32 %v41, %v189
  %v191 = vpop.f32.mrb[0].mxu0
  %192 = vmatprep.mubr.bf16.mxu0 0
  %193 = vmatmul.mubr.bf16.gmra.mrb[0].mxu0 %v128
  %v194 = vpop.f32.mrb[0].mxu0
  %v195 = vadd.f32 %v42, %v194
  %v196 = vpop.f32.mrb[0].mxu0
  %v197 = vpop.f32.mrb[0].mxu0
  %v198 = vadd.f32 %v43, %v197
  %v199 = vpop.f32.mrb[0].mxu0
  %200 = vmatprep.mubr.bf16.mxu0 0
  %201 = vmatmul.mubr.bf16.gmra.mrb[0].mxu0 %v131
  %v202 = vpop.f32.mrb[0].mxu0
  %v203 = vadd.f32 %v44, %v202
  %v204 = vpop.f32.mrb[0].mxu0
  %v205 = vpop.f32.mrb[0].mxu0
  %v206 = vadd.f32 %v45, %v205
  %v207 = vpop.f32.mrb[0].mxu0
  %208 = vmatprep.mubr.bf16.mxu0 0
  %209 = vmatmul.mubr.bf16.gmra.mrb[0].mxu0 %v134
  %v210 = vpop.f32.mrb[0].mxu0
  %v211 = vadd.f32 %v46, %v210
  %v212 = vpop.f32.mrb[0].mxu0
  %v213 = vpop.f32.mrb[0].mxu0
  %v214 = vadd.f32 %v47, %v213
  %v215 = vpop.f32.mrb[0].mxu0
  %216 = vmatprep.mubr.bf16.mxu0 0
  %217 = vmatmul.mubr.bf16.gmra.mrb[0].mxu0 %v137
  %v218 = vpop.f32.mrb[0].mxu0
  %v219 = vadd.f32 %v48, %v218
  %v220 = vpop.f32.mrb[0].mxu0
  %v221 = vpop.f32.mrb[0].mxu0
  %v222 = vadd.f32 %v49, %v221
  %v223 = vpop.f32.mrb[0].mxu0
  %224 = vmatprep.mubr.bf16.mxu0 0
  %225 = vmatmul.mubr.bf16.gmra.mrb[0].mxu0 %v140
  %v226 = vpop.f32.mrb[0].mxu0
  %v227 = vadd.f32 %v50, %v226
  %v228 = vpop.f32.mrb[0].mxu0
  %v229 = vpop.f32.mrb[0].mxu0
  %v230 = vadd.f32 %v51, %v229
  %v231 = vpop.f32.mrb[0].mxu0
  %232 = vmatprep.mubr.bf16.mxu0 0
  %233 = vmatmul.mubr.bf16.gmra.mrb[0].mxu0 %v143
  %v234 = vpop.f32.mrb[0].mxu0
  %v235 = vadd.f32 %v52, %v234
  %v236 = vpop.f32.mrb[0].mxu0
  %v237 = vpop.f32.mrb[0].mxu0
  %v238 = vadd.f32 %v53, %v237
  %v239 = vpop.f32.mrb[0].mxu0
  %240 = vmatprep.mubr.bf16.mxu0 0
  %241 = vmatmul.mubr.bf16.gmra.mrb[0].mxu0 %v146
  %v242 = vpop.f32.mrb[0].mxu0
  %v243 = vadd.f32 %v54, %v242
  %v244 = vpop.f32.mrb[0].mxu0
  %v245 = vpop.f32.mrb[0].mxu0
  %v246 = vadd.f32 %v55, %v245
  %v247 = vpop.f32.mrb[0].mxu0
  %248 = vdwg.mxu0
  %vm249 = vcmask 64512
  %250 = vst.msk [vmem:[%s3] sm:$0xff] %vm249, %v187
  %251 = vst.msk [vmem:[%s3 + $0x8] sm:$0xff] %vm249, %v190
  %252 = vst.msk [vmem:[%s3 + $0x10] sm:$0xff] %vm249, %v195
  %253 = vst.msk [vmem:[%s3 + $0x18] sm:$0xff] %vm249, %v198
  %254 = vst.msk [vmem:[%s3 + $0x20] sm:$0xff] %vm249, %v203
  %255 = vst.msk [vmem:[%s3 + $0x28] sm:$0xff] %vm249, %v206
  %256 = vst.msk [vmem:[%s3 + $0x30] sm:$0xff] %vm249, %v211
  %257 = vst.msk [vmem:[%s3 + $0x38] sm:$0xff] %vm249, %v214
  %258 = vst.msk [vmem:[%s3 + $0x40] sm:$0xff] %vm249, %v219
  %259 = vst.msk [vmem:[%s3 + $0x48] sm:$0xff] %vm249, %v222
  %260 = vst.msk [vmem:[%s3 + $0x50] sm:$0xff] %vm249, %v227
  %261 = vst.msk [vmem:[%s3 + $0x58] sm:$0xff] %vm249, %v230
  %262 = vst.msk [vmem:[%s3 + $0x60] sm:$0xff] %vm249, %v235
  %263 = vst.msk [vmem:[%s3 + $0x68] sm:$0xff] %vm249, %v238
  %264 = vst.msk [vmem:[%s3 + $0x70] sm:$0xff] %vm249, %v243
  %265 = vst.msk [vmem:[%s3 + $0x78] sm:$0xff] %vm249, %v246
  // Predicated region
  $region14: #{network_block_nchw.19} parent=0 // pred_check
    _
  $region15: #{network_block_nchw.19} parent=0 // pred_check_branch
    %267 = sbr.rel (0) target = $region17
  $region16: #{network_block_nchw.19} parent=0 // pred_region
    _
  $region17: #{network_block_nchw.19} parent=0 // pred_fallthru
    _
  // Predicated region
  $region18: #{network_block_nchw.19} parent=0 // pred_check
    _
  $region19: #{network_block_nchw.19} parent=0 // pred_check_branch
    %269 = sbr.rel (0) target = $region21
  $region20: #{network_block_nchw.19} parent=0 // pred_region
    _
  $region21: #{network_block_nchw.19} parent=0 // pred_fallthru
    _

// kernel: network_block_nchw.22
$region0: #{network_block_nchw.22}
  #allocation0 [shape = 'u32[]', space=smem, size = 0x4, offset = 0x4, fixed_abs, tag = 'smem constant byte address 0x4 - core index']
  #allocation1 [shape = 'u32[144,128]{1,0:T(1,128)}', space=vmem, size = 0x12000, scoped, tag = 'internal scratch']
  %s0 = inlined_call_operand.vmem [shape: bf16[128,72], index: 0, kind: input, shape index: {}]
  %s1 = inlined_call_operand.vmem [shape: bf16[72,8], index: 1, kind: input, shape index: {}]
  %s2 = inlined_call_operand.vmem [shape: f32[128,8], index: 2, kind: output, shape index: {}]
  %s3 = sld [smem:[#allocation0]]
  $region18: #{network_block_nchw.22} parent=0
    _
  %s5 = ssub.s32 1, %s3
  %s6 = scalar_select 0, %s5, %s3
  // Predicated region
  $region2: #{network_block_nchw.22} parent=0 // pred_check
    _
  $region3: #{network_block_nchw.22} parent=0 // pred_check_branch
    %8 = sbr.rel (0) target = $region5
  $region4: #{network_block_nchw.22} parent=0 // pred_region
    _
  $region5: #{network_block_nchw.22} parent=0 // pred_fallthru
    _
  // Predicated region
  $region6: #{network_block_nchw.22} parent=0 // pred_check
    _
  $region7: #{network_block_nchw.22} parent=0 // pred_check_branch
    %10 = sbr.rel (0) target = $region9
  $region8: #{network_block_nchw.22} parent=0 // pred_region
    _
  $region9: #{network_block_nchw.22} parent=0 // pred_fallthru
    _
  %v12 = vld [vmem:[%s0] sm:$0xf]
  %v13 = vld [vmem:[%s0 + $0x4] sm:$0xf]
  %v14 = vld [vmem:[%s0 + $0x8] sm:$0xf]
  %v15 = vld [vmem:[%s0 + $0xc] sm:$0xf]
  %v16 = vld [vmem:[%s0 + $0x10] sm:$0xf]
  %v17 = vld [vmem:[%s0 + $0x14] sm:$0xf]
  %v18 = vld [vmem:[%s0 + $0x18] sm:$0xf]
  %v19 = vld [vmem:[%s0 + $0x1c] sm:$0xf]
  %v20 = vld [vmem:[%s0 + $0x20] sm:$0xf]
  %v21 = vld [vmem:[%s0 + $0x24] sm:$0xf]
  %v22 = vld [vmem:[%s0 + $0x28] sm:$0xf]
  %v23 = vld [vmem:[%s0 + $0x2c] sm:$0xf]
  %v24 = vld [vmem:[%s0 + $0x30] sm:$0xf]
  %v25 = vld [vmem:[%s0 + $0x34] sm:$0xf]
  %v26 = vld [vmem:[%s0 + $0x38] sm:$0xf]
  %v27 = vld [vmem:[%s0 + $0x3c] sm:$0xf]
  %v28 = vld [vmem:[%s1] sm:$0xf]
  %v29 = vld [vmem:[%s1 + $0x4] sm:$0xf]
  %v30 = vld [vmem:[%s1 + $0x8] sm:$0xf]
  %v31 = vld [vmem:[%s1 + $0xc] sm:$0xf]
  %v32 = vld [vmem:[%s1 + $0x10] sm:$0xf]
  %v33 = vld [vmem:[%s1 + $0x14] sm:$0xf]
  %v34 = vld [vmem:[%s1 + $0x18] sm:$0xf]
  %v35 = vld [vmem:[%s1 + $0x1c] sm:$0xf]
  %v36 = vld [vmem:[%s1 + $0x20] sm:$0xf]
  %v53 = vunpack.c.l.b16 %v12
  %v54 = vunpack.c.l.b16 %v13
  %v55 = vunpack.c.l.b16 %v14
  %v56 = vunpack.c.l.b16 %v15
  %v57 = vunpack.c.l.b16 %v16
  %v58 = vunpack.c.l.b16 %v17
  %v59 = vunpack.c.l.b16 %v18
  %v60 = vunpack.c.l.b16 %v19
  %v61 = vunpack.c.l.b16 %v20
  %v62 = vunpack.c.l.b16 %v21
  %v63 = vunpack.c.l.b16 %v22
  %v64 = vunpack.c.l.b16 %v23
  %v65 = vunpack.c.l.b16 %v24
  %v66 = vunpack.c.l.b16 %v25
  %v67 = vunpack.c.l.b16 %v26
  %v68 = vunpack.c.l.b16 %v27
  %v69 = vpack.c.b16 %v54, %v53
  %v70 = vpack.c.b16 %v56, %v55
  %v71 = vpack.c.b16 %v58, %v57
  %v72 = vpack.c.b16 %v60, %v59
  %v73 = vpack.c.b16 %v62, %v61
  %v74 = vpack.c.b16 %v64, %v63
  %v75 = vpack.c.b16 %v66, %v65
  %v76 = vpack.c.b16 %v68, %v67
  %v86 = vunpack.c.l.b16 %v28
  %v87 = vunpack.c.l.b16 %v29
  %v88 = vunpack.c.l.b16 %v30
  %v89 = vunpack.c.l.b16 %v31
  %v90 = vunpack.c.l.b16 %v32
  %v91 = vunpack.c.l.b16 %v33
  %v92 = vunpack.c.l.b16 %v34
  %v93 = vunpack.c.l.b16 %v35
  %v94 = vunpack.c.l.b16 %v36
  %v95 = vpack.c.b16 %v87, %v86
  %v96 = vpack.c.b16 %v89, %v88
  %v97 = vpack.c.b16 %v91, %v90
  %v98 = vpack.c.b16 %v93, %v92
  %v99 = vpack.c.b16 %v94, %v94
  %vm104 = vcmask 588800
  %v106 = vsel %vm104, %v69, 0
  %v109 = vsel %vm104, %v70, 0
  %v112 = vsel %vm104, %v71, 0
  %v115 = vsel %vm104, %v72, 0
  %v118 = vsel %vm104, %v73, 0
  %v121 = vsel %vm104, %v74, 0
  %v124 = vsel %vm104, %v75, 0
  %v127 = vsel %vm104, %v76, 0
  %vm129 = vcmask 1043456
  %v131 = vsel %vm129, %v99, 0
  %133 = vmatprep.subr.bf16.mxu0 0
  %134 = vmatpush1.bf16.msra.mxu0 %v95
  %135 = vmatprep.subr.bf16.mxu0 0
  %136 = vmatpush1.bf16.msra.mxu0 %v96
  %137 = vmatprep.subr.bf16.mxu0 0
  %138 = vmatpush1.bf16.msra.mxu0 %v97
  %139 = vmatprep.subr.bf16.mxu0 0
  %140 = vmatpush1.bf16.msra.mxu0 %v98
  %141 = vmatprep.subr.bf16.mxu0 0
  %142 = vmatpush1.bf16.msra.mxu0 %v131
  %143 = vmatprep.subr.bf16.mxu0 0
  %144 = vmatpush1.bf16.msra.mxu0 0
  %145 = vmatprep.subr.bf16.mxu0 0
  %146 = vmatpush1.bf16.msra.mxu0 0
  %147 = vmatprep.subr.bf16.mxu0 0
  %148 = vmatpush1.bf16.msra.mxu0 0
  %149 = vmatprep.subr.bf16.mxu0 0
  %150 = vmatpush1.bf16.msra.mxu0 0
  %151 = vmatprep.subr.bf16.mxu0 0
  %152 = vmatpush1.bf16.msra.mxu0 0
  %153 = vmatprep.subr.bf16.mxu0 0
  %154 = vmatpush1.bf16.msra.mxu0 0
  %155 = vmatprep.subr.bf16.mxu0 0
  %156 = vmatpush1.bf16.msra.mxu0 0
  %157 = vmatprep.subr.bf16.mxu0 0
  %158 = vmatpush1.bf16.msra.mxu0 0
  %159 = vmatprep.subr.bf16.mxu0 0
  %160 = vmatpush1.bf16.msra.mxu0 0
  %161 = vmatprep.subr.bf16.mxu0 0
  %162 = vmatpush1.bf16.msra.mxu0 0
  %163 = vmatprep.subr.bf16.mxu0 0
  %164 = vmatpush1.bf16.msra.mxu0 0
  %165 = vmatprep.mubr.bf16.mxu0 0
  %166 = vmatmul.mubr.bf16.gmra.mrb[0].mxu0 %v106
  %v167 = vpop.f32.mrb[0].mxu0
  %v168 = vadd.f32 0.0, %v167
  %v169 = vpop.f32.mrb[0].mxu0
  %v170 = vpop.f32.mrb[0].mxu0
  %v171 = vadd.f32 0.0, %v170
  %v172 = vpop.f32.mrb[0].mxu0
  %173 = vmatprep.mubr.bf16.mxu0 0
  %174 = vmatmul.mubr.bf16.gmra.mrb[0].mxu0 %v109
  %v175 = vpop.f32.mrb[0].mxu0
  %v176 = vadd.f32 0.0, %v175
  %v177 = vpop.f32.mrb[0].mxu0
  %v178 = vpop.f32.mrb[0].mxu0
  %v179 = vadd.f32 0.0, %v178
  %v180 = vpop.f32.mrb[0].mxu0
  %181 = vmatprep.mubr.bf16.mxu0 0
  %182 = vmatmul.mubr.bf16.gmra.mrb[0].mxu0 %v112
  %v183 = vpop.f32.mrb[0].mxu0
  %v184 = vadd.f32 0.0, %v183
  %v185 = vpop.f32.mrb[0].mxu0
  %v186 = vpop.f32.mrb[0].mxu0
  %v187 = vadd.f32 0.0, %v186
  %v188 = vpop.f32.mrb[0].mxu0
  %189 = vmatprep.mubr.bf16.mxu0 0
  %190 = vmatmul.mubr.bf16.gmra.mrb[0].mxu0 %v115
  %v191 = vpop.f32.mrb[0].mxu0
  %v192 = vadd.f32 0.0, %v191
  %v193 = vpop.f32.mrb[0].mxu0
  %v194 = vpop.f32.mrb[0].mxu0
  %v195 = vadd.f32 0.0, %v194
  %v196 = vpop.f32.mrb[0].mxu0
  %197 = vmatprep.mubr.bf16.mxu0 0
  %198 = vmatmul.mubr.bf16.gmra.mrb[0].mxu0 %v118
  %v199 = vpop.f32.mrb[0].mxu0
  %v200 = vadd.f32 0.0, %v199
  %v201 = vpop.f32.mrb[0].mxu0
  %v202 = vpop.f32.mrb[0].mxu0
  %v203 = vadd.f32 0.0, %v202
  %v204 = vpop.f32.mrb[0].mxu0
  %205 = vmatprep.mubr.bf16.mxu0 0
  %206 = vmatmul.mubr.bf16.gmra.mrb[0].mxu0 %v121
  %v207 = vpop.f32.mrb[0].mxu0
  %v208 = vadd.f32 0.0, %v207
  %v209 = vpop.f32.mrb[0].mxu0
  %v210 = vpop.f32.mrb[0].mxu0
  %v211 = vadd.f32 0.0, %v210
  %v212 = vpop.f32.mrb[0].mxu0
  %213 = vmatprep.mubr.bf16.mxu0 0
  %214 = vmatmul.mubr.bf16.gmra.mrb[0].mxu0 %v124
  %v215 = vpop.f32.mrb[0].mxu0
  %v216 = vadd.f32 0.0, %v215
  %v217 = vpop.f32.mrb[0].mxu0
  %v218 = vpop.f32.mrb[0].mxu0
  %v219 = vadd.f32 0.0, %v218
  %v220 = vpop.f32.mrb[0].mxu0
  %221 = vmatprep.mubr.bf16.mxu0 0
  %222 = vmatmul.mubr.bf16.gmra.mrb[0].mxu0 %v127
  %v223 = vpop.f32.mrb[0].mxu0
  %v224 = vadd.f32 0.0, %v223
  %v225 = vpop.f32.mrb[0].mxu0
  %v226 = vpop.f32.mrb[0].mxu0
  %v227 = vadd.f32 0.0, %v226
  %v228 = vpop.f32.mrb[0].mxu0
  %229 = vdwg.mxu0
  %vm230 = vcmask 64512
  %231 = vst.msk [vmem:[%s2] sm:$0xff] %vm230, %v168
  %232 = vst.msk [vmem:[%s2 + $0x8] sm:$0xff] %vm230, %v171
  %233 = vst.msk [vmem:[%s2 + $0x10] sm:$0xff] %vm230, %v176
  %234 = vst.msk [vmem:[%s2 + $0x18] sm:$0xff] %vm230, %v179
  %235 = vst.msk [vmem:[%s2 + $0x20] sm:$0xff] %vm230, %v184
  %236 = vst.msk [vmem:[%s2 + $0x28] sm:$0xff] %vm230, %v187
  %237 = vst.msk [vmem:[%s2 + $0x30] sm:$0xff] %vm230, %v192
  %238 = vst.msk [vmem:[%s2 + $0x38] sm:$0xff] %vm230, %v195
  %239 = vst.msk [vmem:[%s2 + $0x40] sm:$0xff] %vm230, %v200
  %240 = vst.msk [vmem:[%s2 + $0x48] sm:$0xff] %vm230, %v203
  %241 = vst.msk [vmem:[%s2 + $0x50] sm:$0xff] %vm230, %v208
  %242 = vst.msk [vmem:[%s2 + $0x58] sm:$0xff] %vm230, %v211
  %243 = vst.msk [vmem:[%s2 + $0x60] sm:$0xff] %vm230, %v216
  %244 = vst.msk [vmem:[%s2 + $0x68] sm:$0xff] %vm230, %v219
  %245 = vst.msk [vmem:[%s2 + $0x70] sm:$0xff] %vm230, %v224
  %246 = vst.msk [vmem:[%s2 + $0x78] sm:$0xff] %vm230, %v227
  // Predicated region
  $region10: #{network_block_nchw.22} parent=0 // pred_check
    _
  $region11: #{network_block_nchw.22} parent=0 // pred_check_branch
    %248 = sbr.rel (0) target = $region13
  $region12: #{network_block_nchw.22} parent=0 // pred_region
    _
  $region13: #{network_block_nchw.22} parent=0 // pred_fallthru
    _
  // Predicated region
  $region14: #{network_block_nchw.22} parent=0 // pred_check
    _
  $region15: #{network_block_nchw.22} parent=0 // pred_check_branch
    %250 = sbr.rel (0) target = $region17
  $region16: #{network_block_nchw.22} parent=0 // pred_region
    _
  $region17: #{network_block_nchw.22} parent=0 // pred_fallthru
    _

</llo_original>
